<compile_context>
chip_gen: v6e
topology: v6e:2x2x1
jax: 0.10.0
libtpu: 0.0.40
codegen_flags: <defaults>
</compile_context>

<pallas_src>
import functools

import numpy as np
import jax
import jax.numpy as jnp
from jax import lax
from jax.experimental import pallas as pl
from jax.experimental.pallas import tpu as pltpu

OMEGA = 100.0
SIGMA = 0.25
NUM_CLASSES = 5
NCP = 128        # lane-dense padded class dimension for the logits tile
C1 = 16          # conv1 output channels
C2 = 32          # conv2 output channels ("layer4" feature channels)
KH = KW = 3
STRIDE = 2
PAD = 1


# ----------------------------------------------------------------------------
# Fused Pallas kernel: conv1 + conv2 + pool/fc + analytic backward + CAM
# ----------------------------------------------------------------------------
def _fused_forward_kernel(col1_ref, w1_ref, b1_ref, sel2_ref, w_all_ref, b2_ref,
                          bsel_ref, fcw_cn_ref, fcb_ref, fcw_nc_ref, ut_ref,
                          logits_ref, att_ref, mask_ref,
                          *, n_taps, c1, c2, m2, sf, batch, inv_sf, omega, sigma):
    f32 = jnp.float32
    bf16 = jnp.bfloat16

    # ---- conv1: im2col matmul (bf16 operands, f32 accumulate) + bias + ReLU ----
    h1 = jnp.dot(col1_ref[...], w1_ref[...], preferred_element_type=f32)
    h1 = jnp.maximum(h1 + b1_ref[...], 0.0).astype(bf16)          # (N1, C1)

    # ---- conv2 (restructured): ONE deep-N matmul  Y = h1 @ W_all  (N1,16)x(16,9*C2),
    #      then 9 tap accumulations  sel_p (M2,N1) @ Y_p (N1,C2)  with K = N1 = 128. ----
    y = jnp.dot(h1, w_all_ref[...], preferred_element_type=f32)   # (N1, 9*C2) f32
    y = y.astype(bf16)                                            # MXU operand for the tap matmuls
    acc = jnp.zeros((m2, c2), f32)
    for p in range(n_taps):                                       # static unroll (9 taps)
        sel_p = sel2_ref[p * m2:(p + 1) * m2, :]                  # (M2, N1) 0/1 bf16 (exact)
        y_p = y[:, p * c2:(p + 1) * c2]                           # (N1, C2)
        acc = acc + jnp.dot(sel_p, y_p, preferred_element_type=f32)
    feats = jnp.maximum(acc + b2_ref[...], 0.0)                   # (M2, C2) f32 ("layer4" features)
    feats_bf = feats.astype(bf16)

    # ---- head: adaptive_avg_pool2d(1) (as matmul) + flatten + [Dropout(eval)=id] + Linear ----
    pooled = jnp.dot(bsel_ref[...], feats_bf, preferred_element_type=f32) * inv_sf   # (B, C2)
    logits = jnp.dot(pooled.astype(bf16), fcw_cn_ref[...],
                     preferred_element_type=f32) + fcb_ref[...]    # (B, NCP), padded cols = -1e30
    logits_ref[...] = logits.astype(logits_ref.dtype)              # lane-dense (B, 128) store

    # ---- analytic eval-mode backward -> Grad-CAM channel weights ----
    b_dim, ncp = logits.shape
    rowmax = jnp.max(logits, axis=1, keepdims=True)
    clsf = lax.broadcasted_iota(jnp.int32, (b_dim, ncp), 1).astype(f32)
    pred = jnp.min(jnp.where(logits >= rowmax, clsf, float(ncp)),
                   axis=1, keepdims=True)                          # first argmax (padding never wins)
    onehot = (clsf == pred).astype(f32)                            # (B, NCP)
    grad_logits = jnp.sum(logits * onehot)                         # batch-summed scalar seed
    wv = (grad_logits * inv_sf) * jnp.dot(onehot.astype(bf16), fcw_nc_ref[...],
                                          preferred_element_type=f32)   # (B, C2) f32

    # ---- CAM: broadcast wv over each batch's Sf rows on the VPU (no rep matmul) ----
    row_id = lax.broadcasted_iota(jnp.int32, (m2, 1), 0)
    wv_rep = jnp.zeros((m2, c2), f32)
    for b in range(batch):                                         # static unroll (B blocks)
        in_b = jnp.logical_and(row_id >= b * sf, row_id < (b + 1) * sf)
        wv_rep = jnp.where(in_b, wv[b:b + 1, :], wv_rep)
    cam = jnp.maximum(jnp.sum(feats * wv_rep, axis=1, keepdims=True), 0.0)   # (M2, 1) f32

    # ---- bilinear upsample as ONE matmul against precomputed kron(RH, RW), lane-dense ----
    att = jnp.dot(bsel_ref[...], cam.astype(bf16) * ut_ref[...],
                  preferred_element_type=f32)                      # (B, H*W)

    amin = jnp.min(att)
    amax = jnp.max(att)
    # NOTE: like the PyTorch reference, no epsilon: amax == amin (all-zero CAM) -> NaN.
    scaled = (att - amin) / (amax - amin)
    mask = jax.nn.sigmoid(omega * (scaled - sigma))

    att_ref[...] = att.astype(att_ref.dtype)
    mask_ref[...] = mask.astype(mask_ref.dtype)


# ----------------------------------------------------------------------------
# Precomputed constants (hoisted + cached; built once per shape, not per trace)
# ----------------------------------------------------------------------------
@functools.lru_cache(maxsize=None)
def _bilinear_matrix(out_size, in_size):
    """1-D matrix reproducing F.interpolate(mode='bilinear', align_corners=False)."""
    R = np.zeros((out_size, in_size), dtype=np.float32)
    scale = in_size / out_size
    for i in range(out_size):
        src = max((i + 0.5) * scale - 0.5, 0.0)
        i0 = min(int(np.floor(src)), in_size - 1)
        i1 = min(i0 + 1, in_size - 1)
        frac = src - np.floor(src)
        R[i, i0] += 1.0 - frac
        R[i, i1] += frac
    return R


@functools.lru_cache(maxsize=None)
def _upsample_matrix_tiled(batch, hf, wf, h, w):
    """(batch*hf*wf, h*w): kron(RH, RW).T tiled per batch block (pre-transposed)."""
    rh = _bilinear_matrix(h, hf)
    rw = _bilinear_matrix(w, wf)
    ut = np.kron(rh, rw).T.astype(np.float32)          # (hf*wf, h*w)
    return np.tile(ut, (batch, 1)).copy()              # (batch*hf*wf, h*w)


@functools.lru_cache(maxsize=None)
def _conv_row_selectors(batch, h_in, w_in, h_out, w_out, kh, kw, stride, pad):
    """0/1 selection matrices mapping conv-output rows to input rows, per tap (i,j).
    Shape (kh*kw*batch*h_out*w_out, batch*h_in*w_in); all-zero rows encode padding."""
    n_in = batch * h_in * w_in
    n_out = batch * h_out * w_out
    sel = np.zeros((kh * kw, n_out, n_in), dtype=np.float32)
    for b in range(batch):
        for ho in range(h_out):
            for wo in range(w_out):
                r_out = (b * h_out + ho) * w_out + wo
                for i in range(kh):
                    for j in range(kw):
                        hi = ho * stride + i - pad
                        wi = wo * stride + j - pad
                        if 0 <= hi < h_in and 0 <= wi < w_in:
                            sel[i * kw + j, r_out, (b * h_in + hi) * w_in + wi] = 1.0
    return sel.reshape(kh * kw * n_out, n_in)


@functools.lru_cache(maxsize=None)
def _batch_select_matrix(batch, sf):
    """bsel (batch, batch*sf): 0/1 block membership (row b sums batch b's rows)."""
    bsel = np.zeros((batch, batch * sf), dtype=np.float32)
    for b in range(batch):
        bsel[b, b * sf:(b + 1) * sf] = 1.0
    return bsel


def _im2col(x, kh, kw, stride, pad):
    """x: (B,C,H,W) -> (B*Ho*Wo, C*kh*kw), column order (c, i, j) matching
    PyTorch's Conv2d weight flattening."""
    B, C, H, W = x.shape
    xp = jnp.pad(x, ((0, 0), (0, 0), (pad, pad), (pad, pad)))
    Ho = (H + 2 * pad - kh) // stride + 1
    Wo = (W + 2 * pad - kw) // stride + 1
    cols = []
    for i in range(kh):
        for j in range(kw):
            cols.append(xp[:, :, i:i + stride * Ho:stride, j:j + stride * Wo:stride])
    col = jnp.stack(cols, axis=2)                       # (B, C, kh*kw, Ho, Wo)
    col = col.transpose(0, 3, 4, 1, 2).reshape(B * Ho * Wo, C * kh * kw)
    return col, Ho, Wo


# ----------------------------------------------------------------------------
# Model
# ----------------------------------------------------------------------------
def init_params(key, in_ch, num_classes):
    k1, k2, k3 = jax.random.split(key, 3)
    return {
        "conv1_w": 0.1 * jax.random.normal(k1, (C1, in_ch, KH, KW), jnp.float32),
        "conv1_b": jnp.zeros((C1,), jnp.float32),
        "conv2_w": 0.1 * jax.random.normal(k2, (C2, C1, KH, KW), jnp.float32),
        "conv2_b": jnp.zeros((C2,), jnp.float32),
        "fc_w": 0.1 * jax.random.normal(k3, (num_classes, C2), jnp.float32),
        "fc_b": jnp.zeros((num_classes,), jnp.float32),
    }


def att_diagnosis_forward(params, x, labels):
    """Eval-mode forward of AttDiagnosisModel.  Returns (logits, att_mask, att)."""
    del labels  # eval path: the model uses its own argmax prediction
    B, Cin, H, W = x.shape
    n_taps = KH * KW

    # conv1 im2col on the (tiny) graph input; everything downstream stays in VMEM.
    col1, H1, W1 = _im2col(x, KH, KW, STRIDE, PAD)              # (B*H1*W1, Cin*9)
    Hf = (H1 + 2 * PAD - KH) // STRIDE + 1
    Wf = (W1 + 2 * PAD - KW) // STRIDE + 1
    Sf = Hf * Wf
    M2 = B * Sf
    N1 = B * H1 * W1

    # weight repacking (tiny, one-off XLA ops on parameters)
    w1 = params["conv1_w"].reshape(C1, Cin * KH * KW).T          # (Cin*9, C1)
    # W_all: (C1, 9*C2), tap-major columns -> Y = h1 @ W_all computes all taps at once.
    w_all = params["conv2_w"].transpose(1, 2, 3, 0).reshape(C1, n_taps * C2)

    # fc padded to a lane-dense 128-class tile; padded bias = -1e30 so argmax ignores it.
    fcw = params["fc_w"]                                         # (nc, C2)
    fcw_cn_pad = jnp.zeros((C2, NCP), jnp.float32).at[:, :NUM_CLASSES].set(fcw.T)
    fcb_pad = jnp.full((1, NCP), -1e30, jnp.float32).at[0, :NUM_CLASSES].set(params["fc_b"])
    fcw_nc_pad = jnp.zeros((NCP, C2), jnp.float32).at[:NUM_CLASSES, :].set(fcw)

    # precomputed constants (0/1 matrices are exact in bf16; ut loses ~1e-3 relative)
    sel2 = jnp.asarray(
        _conv_row_selectors(B, H1, W1, Hf, Wf, KH, KW, STRIDE, PAD), dtype=jnp.bfloat16)
    ut = jnp.asarray(_upsample_matrix_tiled(B, Hf, Wf, H, W), dtype=jnp.bfloat16)
    bsel = jnp.asarray(_batch_select_matrix(B, Sf), dtype=jnp.bfloat16)

    args = (
        col1.astype(jnp.bfloat16),                               # (N1, Cin*9)
        w1.astype(jnp.bfloat16),                                 # (Cin*9, C1)
        params["conv1_b"].reshape(1, C1).astype(jnp.float32),
        sel2,                                                    # (9*M2, N1)
        w_all.astype(jnp.bfloat16),                              # (C1, 9*C2)
        params["conv2_b"].reshape(1, C2).astype(jnp.float32),
        bsel,                                                    # (B, M2)
        fcw_cn_pad.astype(jnp.bfloat16),                         # (C2, NCP)
        fcb_pad,                                                 # (1, NCP) f32
        fcw_nc_pad.astype(jnp.bfloat16),                         # (NCP, C2)
        ut,                                                      # (M2, H*W)
    )

    kernel = functools.partial(
        _fused_forward_kernel, n_taps=n_taps, c1=C1, c2=C2, m2=M2, sf=Sf, batch=B,
        inv_sf=1.0 / float(Sf), omega=OMEGA, sigma=SIGMA)

    flops = 2 * (N1 * (Cin * n_taps) * C1                       # conv1
                 + N1 * C1 * (n_taps * C2)                      # conv2 Y = h1 @ W_all
                 + n_taps * M2 * N1 * C2                        # conv2 tap accumulations
                 + B * M2 * C2 + B * C2 * NCP + B * NCP * C2    # pool + fc + wv
                 + M2 * C2 + M2 * H * W + B * M2 * H * W)       # cam + upsample
    bytes_accessed = sum(int(np.prod(a.shape)) * a.dtype.itemsize for a in args) \
        + 4 * (B * NCP + 2 * B * H * W)
    cost = pl.CostEstimate(flops=int(flops), transcendentals=int(B * H * W),
                           bytes_accessed=int(bytes_accessed))

    vmem = pl.BlockSpec(memory_space=pltpu.MemorySpace.VMEM)
    logits_pad, att_flat, mask_flat = pl.pallas_call(
        kernel,
        out_shape=(jax.ShapeDtypeStruct((B, NCP), jnp.float32),     # lane-dense logits tile
                   jax.ShapeDtypeStruct((B, H * W), jnp.float32),   # lane-dense (256)
                   jax.ShapeDtypeStruct((B, H * W), jnp.float32)),
        in_specs=[vmem] * len(args),
        out_specs=(vmem, vmem, vmem),
        cost_estimate=cost,
    )(*args)

    logits = logits_pad[:, :NUM_CLASSES]
    att = att_flat.reshape(B, 1, H, W)
    att_mask = mask_flat.reshape(B, 1, H, W)
    return logits, att_mask, att


# ----------------------------------------------------------------------------
if __name__ == "__main__":
    key = jax.random.PRNGKey(0)
    kx, kl, kp = jax.random.split(key, 3)

    B, C, H, W = 2, 3, 16, 16
    x = jax.random.normal(kx, (B, C, H, W), jnp.float32)
    labels = jax.random.randint(kl, (B,), 0, NUM_CLASSES)

    params = init_params(kp, C, NUM_CLASSES)

    logits, att_mask, att = jax.block_until_ready(
        jax.jit(att_diagnosis_forward)(params, x, labels))

    assert logits.shape == (B, NUM_CLASSES)
    assert att_mask.shape == (B, 1, H, W)
    assert att.shape == (B, 1, H, W)
    print("KERNEL_OK")
</pallas_src>

<mosaic_0001>
module attributes {stable_mosaic.version = 11 : i64} {
  func.func @_fused_forward_kernel(%arg0: memref<128x27xbf16, #tpu.memory_space<vmem>>, %arg1: memref<27x16xbf16, #tpu.memory_space<vmem>>, %arg2: memref<1x16xf32, #tpu.memory_space<vmem>>, %arg3: memref<288x128xbf16, #tpu.memory_space<vmem>>, %arg4: memref<16x288xbf16, #tpu.memory_space<vmem>>, %arg5: memref<1x32xf32, #tpu.memory_space<vmem>>, %arg6: memref<2x32xbf16, #tpu.memory_space<vmem>>, %arg7: memref<32x128xbf16, #tpu.memory_space<vmem>>, %arg8: memref<1x128xf32, #tpu.memory_space<vmem>>, %arg9: memref<128x32xbf16, #tpu.memory_space<vmem>>, %arg10: memref<32x256xbf16, #tpu.memory_space<vmem>>, %arg11: memref<2x128xf32, #tpu.memory_space<vmem>>, %arg12: memref<2x256xf32, #tpu.memory_space<vmem>>, %arg13: memref<2x256xf32, #tpu.memory_space<vmem>>) attributes {dimension_semantics = [], scalar_prefetch = 0 : i64, scratch_operands = 0 : i64, tpu.core_type = #tpu.core_type<tc>} {
    %c0 = arith.constant 0 : index
    %c0_0 = arith.constant 0 : index
    %0 = vector.load %arg0[%c0, %c0_0] : memref<128x27xbf16, #tpu.memory_space<vmem>>, vector<128x27xbf16>
    %c0_1 = arith.constant 0 : index
    %c0_2 = arith.constant 0 : index
    %1 = vector.load %arg1[%c0_1, %c0_2] : memref<27x16xbf16, #tpu.memory_space<vmem>>, vector<27x16xbf16>
    %cst = arith.constant dense<0.000000e+00> : vector<128x16xf32>
    %2 = tpu.matmul %0, %1, %cst {dimension_numbers = #tpu.dot_dimension_numbers<[1], [0], [0], [1], [0, 0, 1, 1], [], []>} : vector<128x27xbf16>, vector<27x16xbf16>, vector<128x16xf32> -> vector<128x16xf32>
    %c0_3 = arith.constant 0 : index
    %c0_4 = arith.constant 0 : index
    %3 = vector.load %arg2[%c0_3, %c0_4] : memref<1x16xf32, #tpu.memory_space<vmem>>, vector<1x16xf32>
    %4 = vector.broadcast %3 : vector<1x16xf32> to vector<128x16xf32>
    %5 = arith.addf %2, %4 : vector<128x16xf32>
    %cst_5 = arith.constant 0.000000e+00 : f32
    %6 = vector.broadcast %cst_5 : f32 to vector<128x16xf32>
    %7 = arith.maximumf %5, %6 : vector<128x16xf32>
    %8 = arith.truncf %7 : vector<128x16xf32> to vector<128x16xbf16>
    %c0_6 = arith.constant 0 : index
    %c0_7 = arith.constant 0 : index
    %9 = vector.load %arg4[%c0_6, %c0_7] : memref<16x288xbf16, #tpu.memory_space<vmem>>, vector<16x288xbf16>
    %cst_8 = arith.constant dense<0.000000e+00> : vector<128x288xf32>
    %10 = tpu.matmul %8, %9, %cst_8 {dimension_numbers = #tpu.dot_dimension_numbers<[1], [0], [0], [1], [0, 0, 1, 1], [], []>} : vector<128x16xbf16>, vector<16x288xbf16>, vector<128x288xf32> -> vector<128x288xf32>
    %11 = arith.truncf %10 : vector<128x288xf32> to vector<128x288xbf16>
    %cst_9 = arith.constant 0.000000e+00 : f32
    %12 = vector.broadcast %cst_9 : f32 to vector<32x32xf32>
    %c0_10 = arith.constant 0 : index
    %c0_11 = arith.constant 0 : index
    %13 = vector.load %arg3[%c0_10, %c0_11] : memref<288x128xbf16, #tpu.memory_space<vmem>>, vector<32x128xbf16>
    %14 = vector.extract_strided_slice %11 {offsets = [0, 0], sizes = [128, 32], strides = [1, 1]} : vector<128x288xbf16> to vector<128x32xbf16>
    %cst_12 = arith.constant dense<0.000000e+00> : vector<32x32xf32>
    %15 = tpu.matmul %13, %14, %cst_12 {dimension_numbers = #tpu.dot_dimension_numbers<[1], [0], [0], [1], [0, 0, 1, 1], [], []>} : vector<32x128xbf16>, vector<128x32xbf16>, vector<32x32xf32> -> vector<32x32xf32>
    %16 = arith.addf %12, %15 : vector<32x32xf32>
    %c32 = arith.constant 32 : index
    %c0_13 = arith.constant 0 : index
    %17 = vector.load %arg3[%c32, %c0_13] : memref<288x128xbf16, #tpu.memory_space<vmem>>, vector<32x128xbf16>
    %18 = vector.extract_strided_slice %11 {offsets = [0, 32], sizes = [128, 32], strides = [1, 1]} : vector<128x288xbf16> to vector<128x32xbf16>
    %cst_14 = arith.constant dense<0.000000e+00> : vector<32x32xf32>
    %19 = tpu.matmul %17, %18, %cst_14 {dimension_numbers = #tpu.dot_dimension_numbers<[1], [0], [0], [1], [0, 0, 1, 1], [], []>} : vector<32x128xbf16>, vector<128x32xbf16>, vector<32x32xf32> -> vector<32x32xf32>
    %20 = arith.addf %16, %19 : vector<32x32xf32>
    %c64 = arith.constant 64 : index
    %c0_15 = arith.constant 0 : index
    %21 = vector.load %arg3[%c64, %c0_15] : memref<288x128xbf16, #tpu.memory_space<vmem>>, vector<32x128xbf16>
    %22 = vector.extract_strided_slice %11 {offsets = [0, 64], sizes = [128, 32], strides = [1, 1]} : vector<128x288xbf16> to vector<128x32xbf16>
    %cst_16 = arith.constant dense<0.000000e+00> : vector<32x32xf32>
    %23 = tpu.matmul %21, %22, %cst_16 {dimension_numbers = #tpu.dot_dimension_numbers<[1], [0], [0], [1], [0, 0, 1, 1], [], []>} : vector<32x128xbf16>, vector<128x32xbf16>, vector<32x32xf32> -> vector<32x32xf32>
    %24 = arith.addf %20, %23 : vector<32x32xf32>
    %c96 = arith.constant 96 : index
    %c0_17 = arith.constant 0 : index
    %25 = vector.load %arg3[%c96, %c0_17] : memref<288x128xbf16, #tpu.memory_space<vmem>>, vector<32x128xbf16>
    %26 = vector.extract_strided_slice %11 {offsets = [0, 96], sizes = [128, 32], strides = [1, 1]} : vector<128x288xbf16> to vector<128x32xbf16>
    %cst_18 = arith.constant dense<0.000000e+00> : vector<32x32xf32>
    %27 = tpu.matmul %25, %26, %cst_18 {dimension_numbers = #tpu.dot_dimension_numbers<[1], [0], [0], [1], [0, 0, 1, 1], [], []>} : vector<32x128xbf16>, vector<128x32xbf16>, vector<32x32xf32> -> vector<32x32xf32>
    %28 = arith.addf %24, %27 : vector<32x32xf32>
    %c128 = arith.constant 128 : index
    %c0_19 = arith.constant 0 : index
    %29 = vector.load %arg3[%c128, %c0_19] : memref<288x128xbf16, #tpu.memory_space<vmem>>, vector<32x128xbf16>
    %30 = vector.extract_strided_slice %11 {offsets = [0, 128], sizes = [128, 32], strides = [1, 1]} : vector<128x288xbf16> to vector<128x32xbf16>
    %cst_20 = arith.constant dense<0.000000e+00> : vector<32x32xf32>
    %31 = tpu.matmul %29, %30, %cst_20 {dimension_numbers = #tpu.dot_dimension_numbers<[1], [0], [0], [1], [0, 0, 1, 1], [], []>} : vector<32x128xbf16>, vector<128x32xbf16>, vector<32x32xf32> -> vector<32x32xf32>
    %32 = arith.addf %28, %31 : vector<32x32xf32>
    %c160 = arith.constant 160 : index
    %c0_21 = arith.constant 0 : index
    %33 = vector.load %arg3[%c160, %c0_21] : memref<288x128xbf16, #tpu.memory_space<vmem>>, vector<32x128xbf16>
    %34 = vector.extract_strided_slice %11 {offsets = [0, 160], sizes = [128, 32], strides = [1, 1]} : vector<128x288xbf16> to vector<128x32xbf16>
    %cst_22 = arith.constant dense<0.000000e+00> : vector<32x32xf32>
    %35 = tpu.matmul %33, %34, %cst_22 {dimension_numbers = #tpu.dot_dimension_numbers<[1], [0], [0], [1], [0, 0, 1, 1], [], []>} : vector<32x128xbf16>, vector<128x32xbf16>, vector<32x32xf32> -> vector<32x32xf32>
    %36 = arith.addf %32, %35 : vector<32x32xf32>
    %c192 = arith.constant 192 : index
    %c0_23 = arith.constant 0 : index
    %37 = vector.load %arg3[%c192, %c0_23] : memref<288x128xbf16, #tpu.memory_space<vmem>>, vector<32x128xbf16>
    %38 = vector.extract_strided_slice %11 {offsets = [0, 192], sizes = [128, 32], strides = [1, 1]} : vector<128x288xbf16> to vector<128x32xbf16>
    %cst_24 = arith.constant dense<0.000000e+00> : vector<32x32xf32>
    %39 = tpu.matmul %37, %38, %cst_24 {dimension_numbers = #tpu.dot_dimension_numbers<[1], [0], [0], [1], [0, 0, 1, 1], [], []>} : vector<32x128xbf16>, vector<128x32xbf16>, vector<32x32xf32> -> vector<32x32xf32>
    %40 = arith.addf %36, %39 : vector<32x32xf32>
    %c224 = arith.constant 224 : index
    %c0_25 = arith.constant 0 : index
    %41 = vector.load %arg3[%c224, %c0_25] : memref<288x128xbf16, #tpu.memory_space<vmem>>, vector<32x128xbf16>
    %42 = vector.extract_strided_slice %11 {offsets = [0, 224], sizes = [128, 32], strides = [1, 1]} : vector<128x288xbf16> to vector<128x32xbf16>
    %cst_26 = arith.constant dense<0.000000e+00> : vector<32x32xf32>
    %43 = tpu.matmul %41, %42, %cst_26 {dimension_numbers = #tpu.dot_dimension_numbers<[1], [0], [0], [1], [0, 0, 1, 1], [], []>} : vector<32x128xbf16>, vector<128x32xbf16>, vector<32x32xf32> -> vector<32x32xf32>
    %44 = arith.addf %40, %43 : vector<32x32xf32>
    %c256 = arith.constant 256 : index
    %c0_27 = arith.constant 0 : index
    %45 = vector.load %arg3[%c256, %c0_27] : memref<288x128xbf16, #tpu.memory_space<vmem>>, vector<32x128xbf16>
    %46 = vector.extract_strided_slice %11 {offsets = [0, 256], sizes = [128, 32], strides = [1, 1]} : vector<128x288xbf16> to vector<128x32xbf16>
    %cst_28 = arith.constant dense<0.000000e+00> : vector<32x32xf32>
    %47 = tpu.matmul %45, %46, %cst_28 {dimension_numbers = #tpu.dot_dimension_numbers<[1], [0], [0], [1], [0, 0, 1, 1], [], []>} : vector<32x128xbf16>, vector<128x32xbf16>, vector<32x32xf32> -> vector<32x32xf32>
    %48 = arith.addf %44, %47 : vector<32x32xf32>
    %c0_29 = arith.constant 0 : index
    %c0_30 = arith.constant 0 : index
    %49 = vector.load %arg5[%c0_29, %c0_30] : memref<1x32xf32, #tpu.memory_space<vmem>>, vector<1x32xf32>
    %50 = vector.broadcast %49 : vector<1x32xf32> to vector<32x32xf32>
    %51 = arith.addf %48, %50 : vector<32x32xf32>
    %cst_31 = arith.constant 0.000000e+00 : f32
    %52 = vector.broadcast %cst_31 : f32 to vector<32x32xf32>
    %53 = arith.maximumf %51, %52 : vector<32x32xf32>
    %54 = arith.truncf %53 : vector<32x32xf32> to vector<32x32xbf16>
    %c0_32 = arith.constant 0 : index
    %c0_33 = arith.constant 0 : index
    %55 = vector.load %arg6[%c0_32, %c0_33] : memref<2x32xbf16, #tpu.memory_space<vmem>>, vector<2x32xbf16>
    %cst_34 = arith.constant dense<0.000000e+00> : vector<2x32xf32>
    %56 = tpu.matmul %55, %54, %cst_34 {dimension_numbers = #tpu.dot_dimension_numbers<[1], [0], [0], [1], [0, 0, 1, 1], [], []>} : vector<2x32xbf16>, vector<32x32xbf16>, vector<2x32xf32> -> vector<2x32xf32>
    %cst_35 = arith.constant 6.250000e-02 : f32
    %57 = vector.broadcast %cst_35 : f32 to vector<2x32xf32>
    %58 = arith.mulf %56, %57 : vector<2x32xf32>
    %59 = arith.truncf %58 : vector<2x32xf32> to vector<2x32xbf16>
    %c0_36 = arith.constant 0 : index
    %c0_37 = arith.constant 0 : index
    %60 = vector.load %arg7[%c0_36, %c0_37] : memref<32x128xbf16, #tpu.memory_space<vmem>>, vector<32x128xbf16>
    %cst_38 = arith.constant dense<0.000000e+00> : vector<2x128xf32>
    %61 = tpu.matmul %59, %60, %cst_38 {dimension_numbers = #tpu.dot_dimension_numbers<[1], [0], [0], [1], [0, 0, 1, 1], [], []>} : vector<2x32xbf16>, vector<32x128xbf16>, vector<2x128xf32> -> vector<2x128xf32>
    %c0_39 = arith.constant 0 : index
    %c0_40 = arith.constant 0 : index
    %62 = vector.load %arg8[%c0_39, %c0_40] : memref<1x128xf32, #tpu.memory_space<vmem>>, vector<1x128xf32>
    %63 = vector.broadcast %62 : vector<1x128xf32> to vector<2x128xf32>
    %64 = arith.addf %61, %63 : vector<2x128xf32>
    %c0_41 = arith.constant 0 : index
    %c0_42 = arith.constant 0 : index
    %65 = vector.load %arg11[%c0_41, %c0_42] : memref<2x128xf32, #tpu.memory_space<vmem>>, vector<2x128xf32>
    tpu.vector_store %arg11[%c0_41, %c0_42], %64 {strides = array<i32>} : memref<2x128xf32, #tpu.memory_space<vmem>>, vector<2x128xf32>,
    %cst_43 = arith.constant dense<0xFF800000> : vector<2xf32>
    %66 = vector.multi_reduction <maximumf>, %64, %cst_43 [1] : vector<2x128xf32> to vector<2xf32>
    %67 = vector.shape_cast %66 : vector<2xf32> to vector<2x1xf32>
    %68 = tpu.iota {dimensions = array<i32: 1>} : vector<2x128xi32>
    %69 = arith.sitofp %68 : vector<2x128xi32> to vector<2x128xf32>
    %70 = vector.broadcast %67 : vector<2x1xf32> to vector<2x128xf32>
    %71 = arith.cmpf oge, %64, %70 : vector<2x128xf32>
    %cst_44 = arith.constant 1.280000e+02 : f32
    %72 = vector.broadcast %cst_44 : f32 to vector<2x128xf32>
    %73 = arith.select %71, %69, %72 : vector<2x128xi1>, vector<2x128xf32>
    %cst_45 = arith.constant dense<0x7F800000> : vector<2xf32>
    %74 = vector.multi_reduction <minimumf>, %73, %cst_45 [1] : vector<2x128xf32> to vector<2xf32>
    %75 = vector.shape_cast %74 : vector<2xf32> to vector<2x1xf32>
    %76 = vector.broadcast %75 : vector<2x1xf32> to vector<2x128xf32>
    %77 = arith.cmpf oeq, %69, %76 : vector<2x128xf32>
    %78 = arith.extui %77 : vector<2x128xi1> to vector<2x128xi32>
    %79 = arith.sitofp %78 : vector<2x128xi32> to vector<2x128xf32>
    %80 = arith.mulf %64, %79 : vector<2x128xf32>
    %81 = vector.shape_cast %80 : vector<2x128xf32> to vector<1x2x128xf32>
    %cst_46 = arith.constant dense<0.000000e+00> : vector<1xf32>
    %82 = vector.multi_reduction <add>, %81, %cst_46 [1, 2] : vector<1x2x128xf32> to vector<1xf32>
    %83 = vector.shape_cast %82 : vector<1xf32> to vector<1x1x1xf32>
    %84 = vector.extract %83[0, 0, 0] : f32 from vector<1x1x1xf32>
    %cst_47 = arith.constant 6.250000e-02 : f32
    %85 = arith.mulf %84, %cst_47 : f32
    %86 = arith.truncf %79 : vector<2x128xf32> to vector<2x128xbf16>
    %c0_48 = arith.constant 0 : index
    %c0_49 = arith.constant 0 : index
    %87 = vector.load %arg9[%c0_48, %c0_49] : memref<128x32xbf16, #tpu.memory_space<vmem>>, vector<128x32xbf16>
    %cst_50 = arith.constant dense<0.000000e+00> : vector<2x32xf32>
    %88 = tpu.matmul %86, %87, %cst_50 {dimension_numbers = #tpu.dot_dimension_numbers<[1], [0], [0], [1], [0, 0, 1, 1], [], []>} : vector<2x128xbf16>, vector<128x32xbf16>, vector<2x32xf32> -> vector<2x32xf32>
    %89 = vector.broadcast %85 : f32 to vector<2x32xf32>
    %90 = arith.mulf %89, %88 : vector<2x32xf32>
    %91 = tpu.iota {dimensions = array<i32: 0>} : vector<32x1xi32>
    %cst_51 = arith.constant 0.000000e+00 : f32
    %92 = vector.broadcast %cst_51 : f32 to vector<32x32xf32>
    %c0_i32 = arith.constant 0 : i32
    %93 = vector.broadcast %c0_i32 : i32 to vector<32x1xi32>
    %94 = arith.cmpi sge, %91, %93 : vector<32x1xi32>
    %c16_i32 = arith.constant 16 : i32
    %95 = vector.broadcast %c16_i32 : i32 to vector<32x1xi32>
    %96 = arith.cmpi slt, %91, %95 : vector<32x1xi32>
    %97 = arith.andi %94, %96 : vector<32x1xi1>
    %98 = vector.extract_strided_slice %90 {offsets = [0, 0], sizes = [1, 32], strides = [1, 1]} : vector<2x32xf32> to vector<1x32xf32>
    %99 = vector.shape_cast %97 : vector<32x1xi1> to vector<32x1xi1>
    %100 = vector.broadcast %99 : vector<32x1xi1> to vector<32x32xi1>
    %101 = vector.shape_cast %98 : vector<1x32xf32> to vector<1x32xf32>
    %102 = vector.broadcast %101 : vector<1x32xf32> to vector<32x32xf32>
    %103 = arith.select %100, %102, %92 : vector<32x32xi1>, vector<32x32xf32>
    %c16_i32_52 = arith.constant 16 : i32
    %104 = vector.broadcast %c16_i32_52 : i32 to vector<32x1xi32>
    %105 = arith.cmpi sge, %91, %104 : vector<32x1xi32>
    %c32_i32 = arith.constant 32 : i32
    %106 = vector.broadcast %c32_i32 : i32 to vector<32x1xi32>
    %107 = arith.cmpi slt, %91, %106 : vector<32x1xi32>
    %108 = arith.andi %105, %107 : vector<32x1xi1>
    %109 = vector.extract_strided_slice %90 {offsets = [1, 0], sizes = [1, 32], strides = [1, 1]} : vector<2x32xf32> to vector<1x32xf32>
    %110 = vector.shape_cast %108 : vector<32x1xi1> to vector<32x1xi1>
    %111 = vector.broadcast %110 : vector<32x1xi1> to vector<32x32xi1>
    %112 = vector.shape_cast %109 : vector<1x32xf32> to vector<1x32xf32>
    %113 = vector.broadcast %112 : vector<1x32xf32> to vector<32x32xf32>
    %114 = arith.select %111, %113, %103 : vector<32x32xi1>, vector<32x32xf32>
    %115 = arith.mulf %53, %114 : vector<32x32xf32>
    %cst_53 = arith.constant dense<0.000000e+00> : vector<32xf32>
    %116 = vector.multi_reduction <add>, %115, %cst_53 [1] : vector<32x32xf32> to vector<32xf32>
    %117 = vector.shape_cast %116 : vector<32xf32> to vector<32x1xf32>
    %cst_54 = arith.constant 0.000000e+00 : f32
    %118 = vector.broadcast %cst_54 : f32 to vector<32x1xf32>
    %119 = arith.maximumf %117, %118 : vector<32x1xf32>
    %c0_55 = arith.constant 0 : index
    %c0_56 = arith.constant 0 : index
    %120 = vector.load %arg6[%c0_55, %c0_56] : memref<2x32xbf16, #tpu.memory_space<vmem>>, vector<2x32xbf16>
    %121 = arith.truncf %119 : vector<32x1xf32> to vector<32x1xbf16>
    %c0_57 = arith.constant 0 : index
    %c0_58 = arith.constant 0 : index
    %122 = vector.load %arg10[%c0_57, %c0_58] : memref<32x256xbf16, #tpu.memory_space<vmem>>, vector<32x256xbf16>
    %123 = vector.broadcast %121 : vector<32x1xbf16> to vector<32x256xbf16>
    %124 = arith.mulf %123, %122 : vector<32x256xbf16>
    %cst_59 = arith.constant dense<0.000000e+00> : vector<2x256xf32>
    %125 = tpu.matmul %120, %124, %cst_59 {dimension_numbers = #tpu.dot_dimension_numbers<[1], [0], [0], [1], [0, 0, 1, 1], [], []>} : vector<2x32xbf16>, vector<32x256xbf16>, vector<2x256xf32> -> vector<2x256xf32>
    %126 = vector.shape_cast %125 : vector<2x256xf32> to vector<1x2x256xf32>
    %cst_60 = arith.constant dense<0x7F800000> : vector<1xf32>
    %127 = vector.multi_reduction <minimumf>, %126, %cst_60 [1, 2] : vector<1x2x256xf32> to vector<1xf32>
    %128 = vector.shape_cast %127 : vector<1xf32> to vector<1x1x1xf32>
    %129 = vector.extract %128[0, 0, 0] : f32 from vector<1x1x1xf32>
    %130 = vector.shape_cast %125 : vector<2x256xf32> to vector<1x2x256xf32>
    %cst_61 = arith.constant dense<0xFF800000> : vector<1xf32>
    %131 = vector.multi_reduction <maximumf>, %130, %cst_61 [1, 2] : vector<1x2x256xf32> to vector<1xf32>
    %132 = vector.shape_cast %131 : vector<1xf32> to vector<1x1x1xf32>
    %133 = vector.extract %132[0, 0, 0] : f32 from vector<1x1x1xf32>
    %134 = vector.broadcast %129 : f32 to vector<2x256xf32>
    %135 = arith.subf %125, %134 : vector<2x256xf32>
    %136 = arith.subf %133, %129 : f32
    %137 = vector.broadcast %136 : f32 to vector<2x256xf32>
    %138 = arith.divf %135, %137 : vector<2x256xf32>
    %cst_62 = arith.constant 2.500000e-01 : f32
    %139 = vector.broadcast %cst_62 : f32 to vector<2x256xf32>
    %140 = arith.subf %138, %139 : vector<2x256xf32>
    %cst_63 = arith.constant 1.000000e+02 : f32
    %141 = vector.broadcast %cst_63 : f32 to vector<2x256xf32>
    %142 = arith.mulf %141, %140 : vector<2x256xf32>
    %143 = arith.negf %142 : vector<2x256xf32>
    %144 = math.exp %143 : vector<2x256xf32>
    %cst_64 = arith.constant 1.000000e+00 : f32
    %145 = vector.broadcast %cst_64 : f32 to vector<2x256xf32>
    %146 = arith.addf %145, %144 : vector<2x256xf32>
    %147 = arith.divf %145, %146 : vector<2x256xf32>
    %c0_65 = arith.constant 0 : index
    %c0_66 = arith.constant 0 : index
    %148 = vector.load %arg12[%c0_65, %c0_66] : memref<2x256xf32, #tpu.memory_space<vmem>>, vector<2x256xf32>
    tpu.vector_store %arg12[%c0_65, %c0_66], %125 {strides = array<i32>} : memref<2x256xf32, #tpu.memory_space<vmem>>, vector<2x256xf32>,
    %c0_67 = arith.constant 0 : index
    %c0_68 = arith.constant 0 : index
    %149 = vector.load %arg13[%c0_67, %c0_68] : memref<2x256xf32, #tpu.memory_space<vmem>>, vector<2x256xf32>
    tpu.vector_store %arg13[%c0_67, %c0_68], %147 {strides = array<i32>} : memref<2x256xf32, #tpu.memory_space<vmem>>, vector<2x256xf32>,
    return
  }
}

</mosaic_0001>

<llo_original>
// kernel: att_diagnosis_forward.1
$region0: #{att_diagnosis_forward.1}
  #allocation0 [shape = 'u32[]', space=smem, size = 0x4, offset = 0x4, fixed_abs, tag = 'smem constant byte address 0x4 - core index']
  #allocation1 [shape = 'u32[144,128]{1,0:T(1,128)}', space=vmem, size = 0x12000, scoped, tag = 'internal scratch']
  %s0 = inlined_call_operand.vmem [shape: bf16[128,27], index: 0, kind: input, shape index: {}]
  %s1 = inlined_call_operand.vmem [shape: bf16[27,16], index: 1, kind: input, shape index: {}]
  %s2 = inlined_call_operand.vmem [shape: f32[1,16], index: 2, kind: input, shape index: {}]
  %s3 = inlined_call_operand.vmem [shape: bf16[288,128], index: 3, kind: input, shape index: {}]
  %s4 = inlined_call_operand.vmem [shape: bf16[16,288], index: 4, kind: input, shape index: {}]
  %s5 = inlined_call_operand.vmem [shape: f32[1,32], index: 5, kind: input, shape index: {}]
  %s6 = inlined_call_operand.vmem [shape: bf16[2,32], index: 6, kind: input, shape index: {}]
  %s7 = inlined_call_operand.vmem [shape: bf16[32,128], index: 7, kind: input, shape index: {}]
  %s8 = inlined_call_operand.vmem [shape: f32[1,128], index: 8, kind: input, shape index: {}]
  %s9 = inlined_call_operand.vmem [shape: bf16[128,32], index: 9, kind: input, shape index: {}]
  %s10 = inlined_call_operand.vmem [shape: bf16[32,256], index: 10, kind: input, shape index: {}]
  %s11 = inlined_call_operand.hbm [shape: f32[2,128], index: 11, kind: output, shape index: {0}]
  %s12 = inlined_call_operand.vmem [shape: f32[2,256], index: 12, kind: output, shape index: {1}]
  %s13 = inlined_call_operand.vmem [shape: f32[2,256], index: 13, kind: output, shape index: {2}]
  %14 = xla_tuple %s11, %s12, %s13
  %s15 = sld [smem:[#allocation0]]
  $region70: #{att_diagnosis_forward.1} parent=0
    _
  %s17 = ssub.s32 1, %s15
  %s18 = scalar_select 0, %s17, %s15
  $region1: #{att_diagnosis_forward.1} parent=0
    #allocation2 [shape = 'u8[1024]{0}', space=vmem, size = 0x400, scoped, tag = 'output window, operand 0, single buffered']
    #allocation3 [shape = 's32[1]{0}', space=sflag, size = 0x4, scoped, tag = 'scoped memory for att_diagnosis_forward.1']
    %19 = vsyncpa [#allocation3], 0
    // Predicated region
    $region2: #{att_diagnosis_forward.1} parent=1 // pred_check
      _
    $region3: #{att_diagnosis_forward.1} parent=1 // pred_check_branch
      %21 = sbr.rel (0) target = $region5
    $region4: #{att_diagnosis_forward.1} parent=1 // pred_region
      _
    $region5: #{att_diagnosis_forward.1} parent=1 // pred_fallthru
      _
    // Predicated region
    $region6: #{att_diagnosis_forward.1} parent=1 // pred_check
      _
    $region7: #{att_diagnosis_forward.1} parent=1 // pred_check_branch
      %23 = sbr.rel (0) target = $region9
    $region8: #{att_diagnosis_forward.1} parent=1 // pred_region
      _
    $region9: #{att_diagnosis_forward.1} parent=1 // pred_fallthru
      _
    // Predicated region
    $region10: #{att_diagnosis_forward.1} parent=1 // pred_check
      _
    $region11: #{att_diagnosis_forward.1} parent=1 // pred_check_branch
      %25 = sbr.rel (0) target = $region13
    $region12: #{att_diagnosis_forward.1} parent=1 // pred_region
      _
    $region13: #{att_diagnosis_forward.1} parent=1 // pred_fallthru
      _
    // Predicated region
    $region14: #{att_diagnosis_forward.1} parent=1 // pred_check
      _
    $region15: #{att_diagnosis_forward.1} parent=1 // pred_check_branch
      %27 = sbr.rel (0) target = $region17
    $region16: #{att_diagnosis_forward.1} parent=1 // pred_region
      _
    $region17: #{att_diagnosis_forward.1} parent=1 // pred_fallthru
      _
    // Predicated region
    $region18: #{att_diagnosis_forward.1} parent=1 // pred_check
      _
    $region19: #{att_diagnosis_forward.1} parent=1 // pred_check_branch
      %29 = sbr.rel (0) target = $region21
    $region20: #{att_diagnosis_forward.1} parent=1 // pred_region
      _
    $region21: #{att_diagnosis_forward.1} parent=1 // pred_fallthru
      _
    // Predicated region
    $region22: #{att_diagnosis_forward.1} parent=1 // pred_check
      _
    $region23: #{att_diagnosis_forward.1} parent=1 // pred_check_branch
      %31 = sbr.rel (0) target = $region25
    $region24: #{att_diagnosis_forward.1} parent=1 // pred_region
      _
    $region25: #{att_diagnosis_forward.1} parent=1 // pred_fallthru
      _
    // Predicated region
    $region26: #{att_diagnosis_forward.1} parent=1 // pred_check
      _
    $region27: #{att_diagnosis_forward.1} parent=1 // pred_check_branch
      %33 = sbr.rel (0) target = $region29
    $region28: #{att_diagnosis_forward.1} parent=1 // pred_region
      _
    $region29: #{att_diagnosis_forward.1} parent=1 // pred_fallthru
      _
    // Predicated region
    $region30: #{att_diagnosis_forward.1} parent=1 // pred_check
      _
    $region31: #{att_diagnosis_forward.1} parent=1 // pred_check_branch
      %35 = sbr.rel (0) target = $region33
    $region32: #{att_diagnosis_forward.1} parent=1 // pred_region
      _
    $region33: #{att_diagnosis_forward.1} parent=1 // pred_fallthru
      _
    // Predicated region
    $region34: #{att_diagnosis_forward.1} parent=1 // pred_check
      _
    $region35: #{att_diagnosis_forward.1} parent=1 // pred_check_branch
      %37 = sbr.rel (0) target = $region37
    $region36: #{att_diagnosis_forward.1} parent=1 // pred_region
      _
    $region37: #{att_diagnosis_forward.1} parent=1 // pred_fallthru
      _
    // Predicated region
    $region38: #{att_diagnosis_forward.1} parent=1 // pred_check
      _
    $region39: #{att_diagnosis_forward.1} parent=1 // pred_check_branch
      %39 = sbr.rel (0) target = $region41
    $region40: #{att_diagnosis_forward.1} parent=1 // pred_region
      _
    $region41: #{att_diagnosis_forward.1} parent=1 // pred_fallthru
      _
    // Predicated region
    $region42: #{att_diagnosis_forward.1} parent=1 // pred_check
      _
    $region43: #{att_diagnosis_forward.1} parent=1 // pred_check_branch
      %41 = sbr.rel (0) target = $region45
    $region44: #{att_diagnosis_forward.1} parent=1 // pred_region
      _
    $region45: #{att_diagnosis_forward.1} parent=1 // pred_fallthru
      _
    %v43 = vld [vmem:[%s0] sm:$0xf]
    %v44 = vld [vmem:[%s0 + $0x4] sm:$0xf]
    %v45 = vld [vmem:[%s0 + $0x8] sm:$0xf]
    %v46 = vld [vmem:[%s0 + $0xc] sm:$0xf]
    %v47 = vld [vmem:[%s0 + $0x10] sm:$0xf]
    %v48 = vld [vmem:[%s0 + $0x14] sm:$0xf]
    %v49 = vld [vmem:[%s0 + $0x18] sm:$0xf]
    %v50 = vld [vmem:[%s0 + $0x1c] sm:$0xf]
    %v51 = vld [vmem:[%s0 + $0x20] sm:$0xf]
    %v52 = vld [vmem:[%s0 + $0x24] sm:$0xf]
    %v53 = vld [vmem:[%s0 + $0x28] sm:$0xf]
    %v54 = vld [vmem:[%s0 + $0x2c] sm:$0xf]
    %v55 = vld [vmem:[%s0 + $0x30] sm:$0xf]
    %v56 = vld [vmem:[%s0 + $0x34] sm:$0xf]
    %v57 = vld [vmem:[%s0 + $0x38] sm:$0xf]
    %v58 = vld [vmem:[%s0 + $0x3c] sm:$0xf]
    %v59 = vld [vmem:[%s1] sm:$0xf]
    %v60 = vld [vmem:[%s1 + $0x4] sm:$0xf]
    %v61 = vld [vmem:[%s1 + $0x8] sm:$0xf]
    %v62 = vld [vmem:[%s1 + $0xc] sm:$0x3]
    %v63 = vld [vmem:[%s2] sm:$0x1]
    %v65 = vlaneseq
    %v66 = vshrl.u32 %v65, 7
    %v67 = vsub.s32 0, %v66
    %v68 = vrot.slane %v63, %v67
    %v86 = vunpack.c.l.b16 %v43
    %v87 = vunpack.c.l.b16 %v44
    %v88 = vunpack.c.l.b16 %v45
    %v89 = vunpack.c.l.b16 %v46
    %v90 = vunpack.c.l.b16 %v47
    %v91 = vunpack.c.l.b16 %v48
    %v92 = vunpack.c.l.b16 %v49
    %v93 = vunpack.c.l.b16 %v50
    %v94 = vunpack.c.l.b16 %v51
    %v95 = vunpack.c.l.b16 %v52
    %v96 = vunpack.c.l.b16 %v53
    %v97 = vunpack.c.l.b16 %v54
    %v98 = vunpack.c.l.b16 %v55
    %v99 = vunpack.c.l.b16 %v56
    %v100 = vunpack.c.l.b16 %v57
    %v101 = vunpack.c.l.b16 %v58
    %v102 = vpack.c.b16 %v87, %v86
    %v103 = vpack.c.b16 %v89, %v88
    %v104 = vpack.c.b16 %v91, %v90
    %v105 = vpack.c.b16 %v93, %v92
    %v106 = vpack.c.b16 %v95, %v94
    %v107 = vpack.c.b16 %v97, %v96
    %v108 = vpack.c.b16 %v99, %v98
    %v109 = vpack.c.b16 %v101, %v100
    %v114 = vunpack.c.l.b16 %v59
    %v115 = vunpack.c.l.b16 %v60
    %v116 = vunpack.c.l.b16 %v61
    %v117 = vunpack.c.l.b16 %v62
    %v118 = vpack.c.b16 %v115, %v114
    %v119 = vpack.c.b16 %v117, %v116
    %vm121 = vcmask 220160
    %v123 = vsel %vm121, %v102, 0
    %v126 = vsel %vm121, %v103, 0
    %v129 = vsel %vm121, %v104, 0
    %v132 = vsel %vm121, %v105, 0
    %v135 = vsel %vm121, %v106, 0
    %v138 = vsel %vm121, %v107, 0
    %v141 = vsel %vm121, %v108, 0
    %v144 = vsel %vm121, %v109, 0
    %vm146 = vcmask 1044480
    %vm147 = vcmask 1045504
    %v148 = vsel %vm146, 4294967295, 65535
    %v149 = vsel %vm147, %v148, 0
    %v151 = vand.u32 %v119, %v149
    %153 = vmatprep.subr.bf16.mxu0 0
    %154 = vmatpush1.bf16.msra.mxu0 0
    %155 = vmatprep.subr.bf16.mxu0 0
    %156 = vmatpush1.bf16.msra.mxu0 0
    %157 = vmatprep.subr.bf16.mxu0 0
    %158 = vmatpush1.bf16.msra.mxu0 0
    %159 = vmatprep.subr.bf16.mxu0 0
    %160 = vmatpush1.bf16.msra.mxu0 0
    %161 = vmatprep.subr.bf16.mxu0 0
    %162 = vmatpush1.bf16.msra.mxu0 0
    %163 = vmatprep.subr.bf16.mxu0 0
    %164 = vmatpush1.bf16.msra.mxu0 0
    %165 = vmatprep.subr.bf16.mxu0 0
    %166 = vmatpush1.bf16.msra.mxu0 %v151
    %167 = vmatprep.subr.bf16.mxu0 0
    %168 = vmatpush1.bf16.msra.mxu0 %v118
    %169 = vmatprep.subr.bf16.mxu0 0
    %170 = vmatpush2.bf16.msra.mxu0 0
    %171 = vmatprep.subr.bf16.mxu0 0
    %172 = vmatpush2.bf16.msra.mxu0 0
    %173 = vmatprep.subr.bf16.mxu0 0
    %174 = vmatpush2.bf16.msra.mxu0 0
    %175 = vmatprep.subr.bf16.mxu0 0
    %176 = vmatpush2.bf16.msra.mxu0 0
    %177 = vmatprep.subr.bf16.mxu0 0
    %178 = vmatpush2.bf16.msra.mxu0 0
    %179 = vmatprep.subr.bf16.mxu0 0
    %180 = vmatpush2.bf16.msra.mxu0 0
    %181 = vmatprep.subr.bf16.mxu0 0
    %182 = vmatpush2.bf16.msra.mxu0 0
    %183 = vmatprep.subr.bf16.mxu0 0
    %184 = vmatpush2.bf16.msra.mxu0 0
    %185 = vmatprep.mubr.bf16.mxu0 0
    %186 = vmatmul.mubr.bf16.gmra.mxu0 %v123
    %v187 = vpop.f32.mrf.mxu0
    %v188 = vadd.f32 %v68, %v187
    %v189 = vpop.f32.mrf.mxu0
    %v190 = vpop.f32.mrf.mxu0
    %v191 = vadd.f32 %v68, %v190
    %v192 = vpop.f32.mrf.mxu0
    %193 = vmatprep.mubr.bf16.mxu0 0
    %194 = vmatmul.mubr.bf16.gmra.mxu0 %v126
    %v195 = vpop.f32.mrf.mxu0
    %v196 = vadd.f32 %v68, %v195
    %v197 = vpop.f32.mrf.mxu0
    %v198 = vpop.f32.mrf.mxu0
    %v199 = vadd.f32 %v68, %v198
    %v200 = vpop.f32.mrf.mxu0
    %201 = vmatprep.mubr.bf16.mxu0 0
    %202 = vmatmul.mubr.bf16.gmra.mxu0 %v129
    %v203 = vpop.f32.mrf.mxu0
    %v204 = vadd.f32 %v68, %v203
    %v205 = vpop.f32.mrf.mxu0
    %v206 = vpop.f32.mrf.mxu0
    %v207 = vadd.f32 %v68, %v206
    %v208 = vpop.f32.mrf.mxu0
    %209 = vmatprep.mubr.bf16.mxu0 0
    %210 = vmatmul.mubr.bf16.gmra.mxu0 %v132
    %v211 = vpop.f32.mrf.mxu0
    %v212 = vadd.f32 %v68, %v211
    %v213 = vpop.f32.mrf.mxu0
    %v214 = vpop.f32.mrf.mxu0
    %v215 = vadd.f32 %v68, %v214
    %v216 = vpop.f32.mrf.mxu0
    %217 = vmatprep.mubr.bf16.mxu0 0
    %218 = vmatmul.mubr.bf16.gmra.mxu0 %v135
    %v219 = vpop.f32.mrf.mxu0
    %v220 = vadd.f32 %v68, %v219
    %v221 = vpop.f32.mrf.mxu0
    %v222 = vpop.f32.mrf.mxu0
    %v223 = vadd.f32 %v68, %v222
    %v224 = vpop.f32.mrf.mxu0
    %225 = vmatprep.mubr.bf16.mxu0 0
    %226 = vmatmul.mubr.bf16.gmra.mxu0 %v138
    %v227 = vpop.f32.mrf.mxu0
    %v228 = vadd.f32 %v68, %v227
    %v229 = vpop.f32.mrf.mxu0
    %v230 = vpop.f32.mrf.mxu0
    %v231 = vadd.f32 %v68, %v230
    %v232 = vpop.f32.mrf.mxu0
    %233 = vmatprep.mubr.bf16.mxu0 0
    %234 = vmatmul.mubr.bf16.gmra.mxu0 %v141
    %v235 = vpop.f32.mrf.mxu0
    %v236 = vadd.f32 %v68, %v235
    %v237 = vpop.f32.mrf.mxu0
    %v238 = vpop.f32.mrf.mxu0
    %v239 = vadd.f32 %v68, %v238
    %v240 = vpop.f32.mrf.mxu0
    %241 = vmatprep.mubr.bf16.mxu0 0
    %242 = vmatmul.mubr.bf16.gmra.mxu0 %v144
    %v243 = vpop.f32.mrf.mxu0
    %v244 = vadd.f32 %v68, %v243
    %v245 = vpop.f32.mrf.mxu0
    %v246 = vpop.f32.mrf.mxu0
    %v247 = vadd.f32 %v68, %v246
    %v248 = vpop.f32.mrf.mxu0
    %249 = vdwg.mxu0
    %v250 = vmax.f32 %v188, 0.0
    %v251 = vmax.f32 %v191, 0.0
    %v252 = vmax.f32 %v196, 0.0
    %v253 = vmax.f32 %v199, 0.0
    %v254 = vmax.f32 %v204, 0.0
    %v255 = vmax.f32 %v207, 0.0
    %v256 = vmax.f32 %v212, 0.0
    %v257 = vmax.f32 %v215, 0.0
    %v258 = vmax.f32 %v220, 0.0
    %v259 = vmax.f32 %v223, 0.0
    %v260 = vmax.f32 %v228, 0.0
    %v261 = vmax.f32 %v231, 0.0
    %v262 = vmax.f32 %v236, 0.0
    %v263 = vmax.f32 %v239, 0.0
    %v264 = vmax.f32 %v244, 0.0
    %v265 = vmax.f32 %v247, 0.0
    %v266 = vpack.c.bf16 %v251, %v250
    %v267 = vpack.c.bf16 %v253, %v252
    %v268 = vpack.c.bf16 %v255, %v254
    %v269 = vpack.c.bf16 %v257, %v256
    %v270 = vpack.c.bf16 %v259, %v258
    %v271 = vpack.c.bf16 %v261, %v260
    %v272 = vpack.c.bf16 %v263, %v262
    %v273 = vpack.c.bf16 %v265, %v264
    %v274 = vld [vmem:[%s4] sm:$0xff]
    %v275 = vld [vmem:[%s4 + $0x8] sm:$0xf]
    %v276 = vld [vmem:[%s4 + $0xc] sm:$0xff]
    %v277 = vld [vmem:[%s4 + $0x14] sm:$0xf]
    %v282 = vunpack.c.l.b16 %v274
    %v283 = vunpack.c.h.b16 %v274
    %v284 = vunpack.c.l.b16 %v275
    %v285 = vunpack.c.l.b16 %v276
    %v286 = vunpack.c.h.b16 %v276
    %v287 = vunpack.c.l.b16 %v277
    %v288 = vpack.c.b16 %v285, %v282
    %v289 = vpack.c.b16 %v286, %v283
    %v290 = vpack.c.b16 %v287, %v284
    %vm294 = vcmask 130048
    %v296 = vsel %vm294, %v266, 0
    %v299 = vsel %vm294, %v267, 0
    %v302 = vsel %vm294, %v268, 0
    %v305 = vsel %vm294, %v269, 0
    %v308 = vsel %vm294, %v270, 0
    %v311 = vsel %vm294, %v271, 0
    %v314 = vsel %vm294, %v272, 0
    %v317 = vsel %vm294, %v273, 0
    %319 = vmatprep.subr.bf16.mxu0 0
    %320 = vmatpush1.bf16.msra.mxu0 0
    %321 = vmatprep.subr.bf16.mxu0 0
    %322 = vmatpush1.bf16.msra.mxu0 0
    %323 = vmatprep.subr.bf16.mxu0 0
    %324 = vmatpush1.bf16.msra.mxu0 0
    %325 = vmatprep.subr.bf16.mxu0 0
    %326 = vmatpush1.bf16.msra.mxu0 0
    %327 = vmatprep.subr.bf16.mxu0 0
    %328 = vmatpush1.bf16.msra.mxu0 0
    %329 = vmatprep.subr.bf16.mxu0 0
    %330 = vmatpush1.bf16.msra.mxu0 0
    %331 = vmatprep.subr.bf16.mxu0 0
    %332 = vmatpush1.bf16.msra.mxu0 0
    %333 = vmatprep.subr.bf16.mxu0 %v289
    %334 = vmatpush1.bf16.msra.mxu0 %v288
    %335 = vmatprep.subr.bf16.mxu0 0
    %336 = vmatpush2.bf16.msra.mxu0 0
    %337 = vmatprep.subr.bf16.mxu0 0
    %338 = vmatpush2.bf16.msra.mxu0 0
    %339 = vmatprep.subr.bf16.mxu0 0
    %340 = vmatpush2.bf16.msra.mxu0 0
    %341 = vmatprep.subr.bf16.mxu0 0
    %342 = vmatpush2.bf16.msra.mxu0 0
    %343 = vmatprep.subr.bf16.mxu0 0
    %344 = vmatpush2.bf16.msra.mxu0 0
    %345 = vmatprep.subr.bf16.mxu0 0
    %346 = vmatpush2.bf16.msra.mxu0 0
    %347 = vmatprep.subr.bf16.mxu0 0
    %348 = vmatpush2.bf16.msra.mxu0 0
    %349 = vmatprep.subr.bf16.mxu0 0
    %350 = vmatpush2.bf16.msra.mxu0 0
    %351 = vmatprep.mubr.bf16.mxu0 0
    %352 = vmatmul.mubr.bf16.gmra.mxu0 %v296
    %v353 = vpop.f32.mrf.mxu0
    %v354 = vadd.f32 0.0, %v353
    %v355 = vpop.f32.mrf.mxu0
    %v356 = vadd.f32 0.0, %v355
    %v357 = vpop.f32.mrf.mxu0
    %v358 = vadd.f32 0.0, %v357
    %v359 = vpop.f32.mrf.mxu0
    %v360 = vadd.f32 0.0, %v359
    %361 = vmatprep.mubr.bf16.mxu0 0
    %362 = vmatmul.mubr.bf16.gmra.mxu0 %v299
    %v363 = vpop.f32.mrf.mxu0
    %v364 = vadd.f32 0.0, %v363
    %v365 = vpop.f32.mrf.mxu0
    %v366 = vadd.f32 0.0, %v365
    %v367 = vpop.f32.mrf.mxu0
    %v368 = vadd.f32 0.0, %v367
    %v369 = vpop.f32.mrf.mxu0
    %v370 = vadd.f32 0.0, %v369
    %371 = vmatprep.mubr.bf16.mxu0 0
    %372 = vmatmul.mubr.bf16.gmra.mxu0 %v302
    %v373 = vpop.f32.mrf.mxu0
    %v374 = vadd.f32 0.0, %v373
    %v375 = vpop.f32.mrf.mxu0
    %v376 = vadd.f32 0.0, %v375
    %v377 = vpop.f32.mrf.mxu0
    %v378 = vadd.f32 0.0, %v377
    %v379 = vpop.f32.mrf.mxu0
    %v380 = vadd.f32 0.0, %v379
    %381 = vmatprep.mubr.bf16.mxu0 0
    %382 = vmatmul.mubr.bf16.gmra.mxu0 %v305
    %v383 = vpop.f32.mrf.mxu0
    %v384 = vadd.f32 0.0, %v383
    %v385 = vpop.f32.mrf.mxu0
    %v386 = vadd.f32 0.0, %v385
    %v387 = vpop.f32.mrf.mxu0
    %v388 = vadd.f32 0.0, %v387
    %v389 = vpop.f32.mrf.mxu0
    %v390 = vadd.f32 0.0, %v389
    %391 = vmatprep.mubr.bf16.mxu0 0
    %392 = vmatmul.mubr.bf16.gmra.mxu0 %v308
    %v393 = vpop.f32.mrf.mxu0
    %v394 = vadd.f32 0.0, %v393
    %v395 = vpop.f32.mrf.mxu0
    %v396 = vadd.f32 0.0, %v395
    %v397 = vpop.f32.mrf.mxu0
    %v398 = vadd.f32 0.0, %v397
    %v399 = vpop.f32.mrf.mxu0
    %v400 = vadd.f32 0.0, %v399
    %401 = vmatprep.mubr.bf16.mxu0 0
    %402 = vmatmul.mubr.bf16.gmra.mxu0 %v311
    %v403 = vpop.f32.mrf.mxu0
    %v404 = vadd.f32 0.0, %v403
    %v405 = vpop.f32.mrf.mxu0
    %v406 = vadd.f32 0.0, %v405
    %v407 = vpop.f32.mrf.mxu0
    %v408 = vadd.f32 0.0, %v407
    %v409 = vpop.f32.mrf.mxu0
    %v410 = vadd.f32 0.0, %v409
    %411 = vmatprep.mubr.bf16.mxu0 0
    %412 = vmatmul.mubr.bf16.gmra.mxu0 %v314
    %v413 = vpop.f32.mrf.mxu0
    %v414 = vadd.f32 0.0, %v413
    %v415 = vpop.f32.mrf.mxu0
    %v416 = vadd.f32 0.0, %v415
    %v417 = vpop.f32.mrf.mxu0
    %v418 = vadd.f32 0.0, %v417
    %v419 = vpop.f32.mrf.mxu0
    %v420 = vadd.f32 0.0, %v419
    %421 = vmatprep.mubr.bf16.mxu0 0
    %422 = vmatmul.mubr.bf16.gmra.mxu0 %v317
    %v423 = vpop.f32.mrf.mxu0
    %v424 = vadd.f32 0.0, %v423
    %v425 = vpop.f32.mrf.mxu0
    %v426 = vadd.f32 0.0, %v425
    %v427 = vpop.f32.mrf.mxu0
    %v428 = vadd.f32 0.0, %v427
    %v429 = vpop.f32.mrf.mxu0
    %v430 = vadd.f32 0.0, %v429
    %431 = vdwg.mxu0
    %432 = vmatprep.subr.bf16.mxu0 0
    %433 = vmatpush1.bf16.msra.mxu0 0
    %434 = vmatprep.subr.bf16.mxu0 0
    %435 = vmatpush1.bf16.msra.mxu0 0
    %436 = vmatprep.subr.bf16.mxu0 0
    %437 = vmatpush1.bf16.msra.mxu0 0
    %438 = vmatprep.subr.bf16.mxu0 0
    %439 = vmatpush1.bf16.msra.mxu0 0
    %440 = vmatprep.subr.bf16.mxu0 0
    %441 = vmatpush1.bf16.msra.mxu0 0
    %442 = vmatprep.subr.bf16.mxu0 0
    %443 = vmatpush1.bf16.msra.mxu0 0
    %444 = vmatprep.subr.bf16.mxu0 0
    %445 = vmatpush1.bf16.msra.mxu0 0
    %446 = vmatprep.subr.bf16.mxu0 0
    %447 = vmatpush1.bf16.msra.mxu0 %v290
    %448 = vmatprep.subr.bf16.mxu0 0
    %449 = vmatpush2.bf16.msra.mxu0 0
    %450 = vmatprep.subr.bf16.mxu0 0
    %451 = vmatpush2.bf16.msra.mxu0 0
    %452 = vmatprep.subr.bf16.mxu0 0
    %453 = vmatpush2.bf16.msra.mxu0 0
    %454 = vmatprep.subr.bf16.mxu0 0
    %455 = vmatpush2.bf16.msra.mxu0 0
    %456 = vmatprep.subr.bf16.mxu0 0
    %457 = vmatpush2.bf16.msra.mxu0 0
    %458 = vmatprep.subr.bf16.mxu0 0
    %459 = vmatpush2.bf16.msra.mxu0 0
    %460 = vmatprep.subr.bf16.mxu0 0
    %461 = vmatpush2.bf16.msra.mxu0 0
    %462 = vmatprep.subr.bf16.mxu0 0
    %463 = vmatpush2.bf16.msra.mxu0 0
    %464 = vmatprep.mubr.bf16.mxu0 0
    %465 = vmatmul.mubr.bf16.gmra.mxu0 %v296
    %v466 = vpop.f32.mrf.mxu0
    %v467 = vadd.f32 0.0, %v466
    %v468 = vpop.f32.mrf.mxu0
    %v469 = vpop.f32.mrf.mxu0
    %v470 = vadd.f32 0.0, %v469
    %v471 = vpop.f32.mrf.mxu0
    %472 = vmatprep.mubr.bf16.mxu0 0
    %473 = vmatmul.mubr.bf16.gmra.mxu0 %v299
    %v474 = vpop.f32.mrf.mxu0
    %v475 = vadd.f32 0.0, %v474
    %v476 = vpop.f32.mrf.mxu0
    %v477 = vpop.f32.mrf.mxu0
    %v478 = vadd.f32 0.0, %v477
    %v479 = vpop.f32.mrf.mxu0
    %480 = vmatprep.mubr.bf16.mxu0 0
    %481 = vmatmul.mubr.bf16.gmra.mxu0 %v302
    %v482 = vpop.f32.mrf.mxu0
    %v483 = vadd.f32 0.0, %v482
    %v484 = vpop.f32.mrf.mxu0
    %v485 = vpop.f32.mrf.mxu0
    %v486 = vadd.f32 0.0, %v485
    %v487 = vpop.f32.mrf.mxu0
    %488 = vmatprep.mubr.bf16.mxu0 0
    %489 = vmatmul.mubr.bf16.gmra.mxu0 %v305
    %v490 = vpop.f32.mrf.mxu0
    %v491 = vadd.f32 0.0, %v490
    %v492 = vpop.f32.mrf.mxu0
    %v493 = vpop.f32.mrf.mxu0
    %v494 = vadd.f32 0.0, %v493
    %v495 = vpop.f32.mrf.mxu0
    %496 = vmatprep.mubr.bf16.mxu0 0
    %497 = vmatmul.mubr.bf16.gmra.mxu0 %v308
    %v498 = vpop.f32.mrf.mxu0
    %v499 = vadd.f32 0.0, %v498
    %v500 = vpop.f32.mrf.mxu0
    %v501 = vpop.f32.mrf.mxu0
    %v502 = vadd.f32 0.0, %v501
    %v503 = vpop.f32.mrf.mxu0
    %504 = vmatprep.mubr.bf16.mxu0 0
    %505 = vmatmul.mubr.bf16.gmra.mxu0 %v311
    %v506 = vpop.f32.mrf.mxu0
    %v507 = vadd.f32 0.0, %v506
    %v508 = vpop.f32.mrf.mxu0
    %v509 = vpop.f32.mrf.mxu0
    %v510 = vadd.f32 0.0, %v509
    %v511 = vpop.f32.mrf.mxu0
    %512 = vmatprep.mubr.bf16.mxu0 0
    %513 = vmatmul.mubr.bf16.gmra.mxu0 %v314
    %v514 = vpop.f32.mrf.mxu0
    %v515 = vadd.f32 0.0, %v514
    %v516 = vpop.f32.mrf.mxu0
    %v517 = vpop.f32.mrf.mxu0
    %v518 = vadd.f32 0.0, %v517
    %v519 = vpop.f32.mrf.mxu0
    %520 = vmatprep.mubr.bf16.mxu0 0
    %521 = vmatmul.mubr.bf16.gmra.mxu0 %v317
    %v522 = vpop.f32.mrf.mxu0
    %v523 = vadd.f32 0.0, %v522
    %v524 = vpop.f32.mrf.mxu0
    %v525 = vpop.f32.mrf.mxu0
    %v526 = vadd.f32 0.0, %v525
    %v527 = vpop.f32.mrf.mxu0
    %528 = vdwg.mxu0
    %v529 = vpack.c.bf16 %v358, %v354
    %v530 = vpack.c.bf16 %v360, %v356
    %v531 = vpack.c.bf16 %v470, %v467
    %v532 = vpack.c.bf16 %v368, %v364
    %v533 = vpack.c.bf16 %v370, %v366
    %v534 = vpack.c.bf16 %v478, %v475
    %v535 = vpack.c.bf16 %v378, %v374
    %v536 = vpack.c.bf16 %v380, %v376
    %v537 = vpack.c.bf16 %v486, %v483
    %v538 = vpack.c.bf16 %v388, %v384
    %v539 = vpack.c.bf16 %v390, %v386
    %v540 = vpack.c.bf16 %v494, %v491
    %v541 = vpack.c.bf16 %v398, %v394
    %v542 = vpack.c.bf16 %v400, %v396
    %v543 = vpack.c.bf16 %v502, %v499
    %v544 = vpack.c.bf16 %v408, %v404
    %v545 = vpack.c.bf16 %v410, %v406
    %v546 = vpack.c.bf16 %v510, %v507
    %v547 = vpack.c.bf16 %v418, %v414
    %v548 = vpack.c.bf16 %v420, %v416
    %v549 = vpack.c.bf16 %v518, %v515
    %v550 = vpack.c.bf16 %v428, %v424
    %v551 = vpack.c.bf16 %v430, %v426
    %v552 = vpack.c.bf16 %v526, %v523
    %v553 = vld [vmem:[%s3] sm:$0xf]
    %v554 = vld [vmem:[%s3 + $0x4] sm:$0xf]
    %v555 = vld [vmem:[%s3 + $0x8] sm:$0xf]
    %v556 = vld [vmem:[%s3 + $0xc] sm:$0xf]
    %v557 = vld [vmem:[%s3 + $0x10] sm:$0xf]
    %v558 = vld [vmem:[%s3 + $0x14] sm:$0xf]
    %v559 = vld [vmem:[%s3 + $0x18] sm:$0xf]
    %v560 = vld [vmem:[%s3 + $0x1c] sm:$0xf]
    %v565 = vunpack.c.l.b16 %v557
    %v566 = vunpack.c.l.b16 %v558
    %v567 = vunpack.c.l.b16 %v559
    %v568 = vunpack.c.l.b16 %v560
    %v569 = vpack.c.b16 %v566, %v565
    %v570 = vpack.c.b16 %v568, %v567
    %581 = vrot.lane.b32.xlu0 %v529, 96
    %v582 = vpop.permute.xlu0 %581
    %583 = vrot.lane.b32.xlu0 %v532, 96
    %v584 = vpop.permute.xlu0 %583
    %585 = vrot.lane.b32.xlu0 %v535, 96
    %v586 = vpop.permute.xlu0 %585
    %587 = vrot.lane.b32.xlu0 %v538, 96
    %v588 = vpop.permute.xlu0 %587
    %589 = vrot.lane.b32.xlu0 %v541, 96
    %v590 = vpop.permute.xlu0 %589
    %591 = vrot.lane.b32.xlu0 %v544, 96
    %v592 = vpop.permute.xlu0 %591
    %593 = vrot.lane.b32.xlu0 %v547, 96
    %v594 = vpop.permute.xlu0 %593
    %595 = vrot.lane.b32.xlu0 %v550, 96
    %v596 = vpop.permute.xlu0 %595
    %605 = vmatprep.subr.bf16.mxu0 0
    %606 = vmatpush1.bf16.msra.mxu0 %v596
    %607 = vmatprep.subr.bf16.mxu0 0
    %608 = vmatpush1.bf16.msra.mxu0 %v594
    %609 = vmatprep.subr.bf16.mxu0 0
    %610 = vmatpush1.bf16.msra.mxu0 %v592
    %611 = vmatprep.subr.bf16.mxu0 0
    %612 = vmatpush1.bf16.msra.mxu0 %v590
    %613 = vmatprep.subr.bf16.mxu0 0
    %614 = vmatpush1.bf16.msra.mxu0 %v588
    %615 = vmatprep.subr.bf16.mxu0 0
    %616 = vmatpush1.bf16.msra.mxu0 %v586
    %617 = vmatprep.subr.bf16.mxu0 0
    %618 = vmatpush1.bf16.msra.mxu0 %v584
    %619 = vmatprep.subr.bf16.mxu0 0
    %620 = vmatpush1.bf16.msra.mxu0 %v582
    %621 = vmatprep.subr.bf16.mxu0 0
    %622 = vmatpush2.bf16.msra.mxu0 0
    %623 = vmatprep.subr.bf16.mxu0 0
    %624 = vmatpush2.bf16.msra.mxu0 0
    %625 = vmatprep.subr.bf16.mxu0 0
    %626 = vmatpush2.bf16.msra.mxu0 0
    %627 = vmatprep.subr.bf16.mxu0 0
    %628 = vmatpush2.bf16.msra.mxu0 0
    %629 = vmatprep.subr.bf16.mxu0 0
    %630 = vmatpush2.bf16.msra.mxu0 0
    %631 = vmatprep.subr.bf16.mxu0 0
    %632 = vmatpush2.bf16.msra.mxu0 0
    %633 = vmatprep.subr.bf16.mxu0 0
    %634 = vmatpush2.bf16.msra.mxu0 0
    %635 = vmatprep.subr.bf16.mxu0 0
    %636 = vmatpush2.bf16.msra.mxu0 0
    %637 = vmatprep.mubr.bf16.mxu0 0
    %638 = vmatmul.mubr.bf16.gmra.mxu0 %v569
    %v639 = vpop.f32.mrf.mxu0
    %v640 = vadd.f32 0.0, %v639
    %v641 = vpop.f32.mrf.mxu0
    %v642 = vpop.f32.mrf.mxu0
    %v643 = vadd.f32 0.0, %v642
    %v644 = vpop.f32.mrf.mxu0
    %645 = vmatprep.mubr.bf16.mxu0 0
    %646 = vmatmul.mubr.bf16.gmra.mxu0 %v570
    %v647 = vpop.f32.mrf.mxu0
    %v648 = vadd.f32 0.0, %v647
    %v649 = vpop.f32.mrf.mxu0
    %v650 = vpop.f32.mrf.mxu0
    %v651 = vadd.f32 0.0, %v650
    %v652 = vpop.f32.mrf.mxu0
    %653 = vdwg.mxu0
    %v658 = vunpack.c.l.b16 %v553
    %v659 = vunpack.c.l.b16 %v554
    %v660 = vunpack.c.l.b16 %v555
    %v661 = vunpack.c.l.b16 %v556
    %v662 = vpack.c.b16 %v659, %v658
    %v663 = vpack.c.b16 %v661, %v660
    %666 = vmatprep.subr.bf16.mxu0 0
    %667 = vmatpush1.bf16.msra.mxu0 %v550
    %668 = vmatprep.subr.bf16.mxu0 0
    %669 = vmatpush1.bf16.msra.mxu0 %v547
    %670 = vmatprep.subr.bf16.mxu0 0
    %671 = vmatpush1.bf16.msra.mxu0 %v544
    %672 = vmatprep.subr.bf16.mxu0 0
    %673 = vmatpush1.bf16.msra.mxu0 %v541
    %674 = vmatprep.subr.bf16.mxu0 0
    %675 = vmatpush1.bf16.msra.mxu0 %v538
    %676 = vmatprep.subr.bf16.mxu0 0
    %677 = vmatpush1.bf16.msra.mxu0 %v535
    %678 = vmatprep.subr.bf16.mxu0 0
    %679 = vmatpush1.bf16.msra.mxu0 %v532
    %680 = vmatprep.subr.bf16.mxu0 0
    %681 = vmatpush1.bf16.msra.mxu0 %v529
    %682 = vmatprep.subr.bf16.mxu0 0
    %683 = vmatpush2.bf16.msra.mxu0 0
    %684 = vmatprep.subr.bf16.mxu0 0
    %685 = vmatpush2.bf16.msra.mxu0 0
    %686 = vmatprep.subr.bf16.mxu0 0
    %687 = vmatpush2.bf16.msra.mxu0 0
    %688 = vmatprep.subr.bf16.mxu0 0
    %689 = vmatpush2.bf16.msra.mxu0 0
    %690 = vmatprep.subr.bf16.mxu0 0
    %691 = vmatpush2.bf16.msra.mxu0 0
    %692 = vmatprep.subr.bf16.mxu0 0
    %693 = vmatpush2.bf16.msra.mxu0 0
    %694 = vmatprep.subr.bf16.mxu0 0
    %695 = vmatpush2.bf16.msra.mxu0 0
    %696 = vmatprep.subr.bf16.mxu0 0
    %697 = vmatpush2.bf16.msra.mxu0 0
    %698 = vmatprep.mubr.bf16.mxu0 0
    %699 = vmatmul.mubr.bf16.gmra.mxu0 %v662
    %v700 = vpop.f32.mrf.mxu0
    %v701 = vadd.f32 %v640, %v700
    %v702 = vpop.f32.mrf.mxu0
    %v703 = vpop.f32.mrf.mxu0
    %v704 = vadd.f32 %v643, %v703
    %v705 = vpop.f32.mrf.mxu0
    %706 = vmatprep.mubr.bf16.mxu0 0
    %707 = vmatmul.mubr.bf16.gmra.mxu0 %v663
    %v708 = vpop.f32.mrf.mxu0
    %v709 = vadd.f32 %v648, %v708
    %v710 = vpop.f32.mrf.mxu0
    %v711 = vpop.f32.mrf.mxu0
    %v712 = vadd.f32 %v651, %v711
    %v713 = vpop.f32.mrf.mxu0
    %714 = vdwg.mxu0
    %v715 = vld [vmem:[%s3 + $0x20] sm:$0xf]
    %v716 = vld [vmem:[%s3 + $0x24] sm:$0xf]
    %v717 = vld [vmem:[%s3 + $0x28] sm:$0xf]
    %v718 = vld [vmem:[%s3 + $0x2c] sm:$0xf]
    %v723 = vunpack.c.l.b16 %v715
    %v724 = vunpack.c.l.b16 %v716
    %v725 = vunpack.c.l.b16 %v717
    %v726 = vunpack.c.l.b16 %v718
    %v727 = vpack.c.b16 %v724, %v723
    %v728 = vpack.c.b16 %v726, %v725
    %731 = vrot.lane.b32.xlu0 %v529, 64
    %v732 = vpop.permute.xlu0 %731
    %733 = vrot.lane.b32.xlu0 %v532, 64
    %v734 = vpop.permute.xlu0 %733
    %735 = vrot.lane.b32.xlu0 %v535, 64
    %v736 = vpop.permute.xlu0 %735
    %737 = vrot.lane.b32.xlu0 %v538, 64
    %v738 = vpop.permute.xlu0 %737
    %739 = vrot.lane.b32.xlu0 %v541, 64
    %v740 = vpop.permute.xlu0 %739
    %741 = vrot.lane.b32.xlu0 %v544, 64
    %v742 = vpop.permute.xlu0 %741
    %743 = vrot.lane.b32.xlu0 %v547, 64
    %v744 = vpop.permute.xlu0 %743
    %745 = vrot.lane.b32.xlu0 %v550, 64
    %v746 = vpop.permute.xlu0 %745
    %755 = vmatprep.subr.bf16.mxu0 0
    %756 = vmatpush1.bf16.msra.mxu0 %v746
    %757 = vmatprep.subr.bf16.mxu0 0
    %758 = vmatpush1.bf16.msra.mxu0 %v744
    %759 = vmatprep.subr.bf16.mxu0 0
    %760 = vmatpush1.bf16.msra.mxu0 %v742
    %761 = vmatprep.subr.bf16.mxu0 0
    %762 = vmatpush1.bf16.msra.mxu0 %v740
    %763 = vmatprep.subr.bf16.mxu0 0
    %764 = vmatpush1.bf16.msra.mxu0 %v738
    %765 = vmatprep.subr.bf16.mxu0 0
    %766 = vmatpush1.bf16.msra.mxu0 %v736
    %767 = vmatprep.subr.bf16.mxu0 0
    %768 = vmatpush1.bf16.msra.mxu0 %v734
    %769 = vmatprep.subr.bf16.mxu0 0
    %770 = vmatpush1.bf16.msra.mxu0 %v732
    %771 = vmatprep.subr.bf16.mxu0 0
    %772 = vmatpush2.bf16.msra.mxu0 0
    %773 = vmatprep.subr.bf16.mxu0 0
    %774 = vmatpush2.bf16.msra.mxu0 0
    %775 = vmatprep.subr.bf16.mxu0 0
    %776 = vmatpush2.bf16.msra.mxu0 0
    %777 = vmatprep.subr.bf16.mxu0 0
    %778 = vmatpush2.bf16.msra.mxu0 0
    %779 = vmatprep.subr.bf16.mxu0 0
    %780 = vmatpush2.bf16.msra.mxu0 0
    %781 = vmatprep.subr.bf16.mxu0 0
    %782 = vmatpush2.bf16.msra.mxu0 0
    %783 = vmatprep.subr.bf16.mxu0 0
    %784 = vmatpush2.bf16.msra.mxu0 0
    %785 = vmatprep.subr.bf16.mxu0 0
    %786 = vmatpush2.bf16.msra.mxu0 0
    %787 = vmatprep.mubr.bf16.mxu0 0
    %788 = vmatmul.mubr.bf16.gmra.mxu0 %v727
    %v789 = vpop.f32.mrf.mxu0
    %v790 = vadd.f32 0.0, %v789
    %v791 = vpop.f32.mrf.mxu0
    %v792 = vpop.f32.mrf.mxu0
    %v793 = vadd.f32 0.0, %v792
    %v794 = vpop.f32.mrf.mxu0
    %795 = vmatprep.mubr.bf16.mxu0 0
    %796 = vmatmul.mubr.bf16.gmra.mxu0 %v728
    %v797 = vpop.f32.mrf.mxu0
    %v798 = vadd.f32 0.0, %v797
    %v799 = vpop.f32.mrf.mxu0
    %v800 = vpop.f32.mrf.mxu0
    %v801 = vadd.f32 0.0, %v800
    %v802 = vpop.f32.mrf.mxu0
    %803 = vdwg.mxu0
    %v804 = vadd.f32 %v701, %v790
    %v805 = vadd.f32 %v704, %v793
    %v806 = vadd.f32 %v709, %v798
    %v807 = vadd.f32 %v712, %v801
    %v808 = vld [vmem:[%s3 + $0x30] sm:$0xf]
    %v809 = vld [vmem:[%s3 + $0x34] sm:$0xf]
    %v810 = vld [vmem:[%s3 + $0x38] sm:$0xf]
    %v811 = vld [vmem:[%s3 + $0x3c] sm:$0xf]
    %v816 = vunpack.c.l.b16 %v808
    %v817 = vunpack.c.l.b16 %v809
    %v818 = vunpack.c.l.b16 %v810
    %v819 = vunpack.c.l.b16 %v811
    %v820 = vpack.c.b16 %v817, %v816
    %v821 = vpack.c.b16 %v819, %v818
    %824 = vrot.lane.b32.xlu0 %v529, 32
    %v825 = vpop.permute.xlu0 %824
    %826 = vrot.lane.b32.xlu0 %v532, 32
    %v827 = vpop.permute.xlu0 %826
    %828 = vrot.lane.b32.xlu0 %v535, 32
    %v829 = vpop.permute.xlu0 %828
    %830 = vrot.lane.b32.xlu0 %v538, 32
    %v831 = vpop.permute.xlu0 %830
    %832 = vrot.lane.b32.xlu0 %v541, 32
    %v833 = vpop.permute.xlu0 %832
    %834 = vrot.lane.b32.xlu0 %v544, 32
    %v835 = vpop.permute.xlu0 %834
    %836 = vrot.lane.b32.xlu0 %v547, 32
    %v837 = vpop.permute.xlu0 %836
    %838 = vrot.lane.b32.xlu0 %v550, 32
    %v839 = vpop.permute.xlu0 %838
    %848 = vmatprep.subr.bf16.mxu0 0
    %849 = vmatpush1.bf16.msra.mxu0 %v839
    %850 = vmatprep.subr.bf16.mxu0 0
    %851 = vmatpush1.bf16.msra.mxu0 %v837
    %852 = vmatprep.subr.bf16.mxu0 0
    %853 = vmatpush1.bf16.msra.mxu0 %v835
    %854 = vmatprep.subr.bf16.mxu0 0
    %855 = vmatpush1.bf16.msra.mxu0 %v833
    %856 = vmatprep.subr.bf16.mxu0 0
    %857 = vmatpush1.bf16.msra.mxu0 %v831
    %858 = vmatprep.subr.bf16.mxu0 0
    %859 = vmatpush1.bf16.msra.mxu0 %v829
    %860 = vmatprep.subr.bf16.mxu0 0
    %861 = vmatpush1.bf16.msra.mxu0 %v827
    %862 = vmatprep.subr.bf16.mxu0 0
    %863 = vmatpush1.bf16.msra.mxu0 %v825
    %864 = vmatprep.subr.bf16.mxu0 0
    %865 = vmatpush2.bf16.msra.mxu0 0
    %866 = vmatprep.subr.bf16.mxu0 0
    %867 = vmatpush2.bf16.msra.mxu0 0
    %868 = vmatprep.subr.bf16.mxu0 0
    %869 = vmatpush2.bf16.msra.mxu0 0
    %870 = vmatprep.subr.bf16.mxu0 0
    %871 = vmatpush2.bf16.msra.mxu0 0
    %872 = vmatprep.subr.bf16.mxu0 0
    %873 = vmatpush2.bf16.msra.mxu0 0
    %874 = vmatprep.subr.bf16.mxu0 0
    %875 = vmatpush2.bf16.msra.mxu0 0
    %876 = vmatprep.subr.bf16.mxu0 0
    %877 = vmatpush2.bf16.msra.mxu0 0
    %878 = vmatprep.subr.bf16.mxu0 0
    %879 = vmatpush2.bf16.msra.mxu0 0
    %880 = vmatprep.mubr.bf16.mxu0 0
    %881 = vmatmul.mubr.bf16.gmra.mxu0 %v820
    %v882 = vpop.f32.mrf.mxu0
    %v883 = vadd.f32 0.0, %v882
    %v884 = vpop.f32.mrf.mxu0
    %v885 = vpop.f32.mrf.mxu0
    %v886 = vadd.f32 0.0, %v885
    %v887 = vpop.f32.mrf.mxu0
    %888 = vmatprep.mubr.bf16.mxu0 0
    %889 = vmatmul.mubr.bf16.gmra.mxu0 %v821
    %v890 = vpop.f32.mrf.mxu0
    %v891 = vadd.f32 0.0, %v890
    %v892 = vpop.f32.mrf.mxu0
    %v893 = vpop.f32.mrf.mxu0
    %v894 = vadd.f32 0.0, %v893
    %v895 = vpop.f32.mrf.mxu0
    %896 = vdwg.mxu0
    %v897 = vadd.f32 %v804, %v883
    %v898 = vadd.f32 %v805, %v886
    %v899 = vadd.f32 %v806, %v891
    %v900 = vadd.f32 %v807, %v894
    %v901 = vld [vmem:[%s3 + $0x40] sm:$0xf]
    %v902 = vld [vmem:[%s3 + $0x44] sm:$0xf]
    %v903 = vld [vmem:[%s3 + $0x48] sm:$0xf]
    %v904 = vld [vmem:[%s3 + $0x4c] sm:$0xf]
    %v909 = vunpack.c.l.b16 %v901
    %v910 = vunpack.c.l.b16 %v902
    %v911 = vunpack.c.l.b16 %v903
    %v912 = vunpack.c.l.b16 %v904
    %v913 = vpack.c.b16 %v910, %v909
    %v914 = vpack.c.b16 %v912, %v911
    %917 = vmatprep.subr.bf16.mxu0 0
    %918 = vmatpush1.bf16.msra.mxu0 %v551
    %919 = vmatprep.subr.bf16.mxu0 0
    %920 = vmatpush1.bf16.msra.mxu0 %v548
    %921 = vmatprep.subr.bf16.mxu0 0
    %922 = vmatpush1.bf16.msra.mxu0 %v545
    %923 = vmatprep.subr.bf16.mxu0 0
    %924 = vmatpush1.bf16.msra.mxu0 %v542
    %925 = vmatprep.subr.bf16.mxu0 0
    %926 = vmatpush1.bf16.msra.mxu0 %v539
    %927 = vmatprep.subr.bf16.mxu0 0
    %928 = vmatpush1.bf16.msra.mxu0 %v536
    %929 = vmatprep.subr.bf16.mxu0 0
    %930 = vmatpush1.bf16.msra.mxu0 %v533
    %931 = vmatprep.subr.bf16.mxu0 0
    %932 = vmatpush1.bf16.msra.mxu0 %v530
    %933 = vmatprep.subr.bf16.mxu0 0
    %934 = vmatpush2.bf16.msra.mxu0 0
    %935 = vmatprep.subr.bf16.mxu0 0
    %936 = vmatpush2.bf16.msra.mxu0 0
    %937 = vmatprep.subr.bf16.mxu0 0
    %938 = vmatpush2.bf16.msra.mxu0 0
    %939 = vmatprep.subr.bf16.mxu0 0
    %940 = vmatpush2.bf16.msra.mxu0 0
    %941 = vmatprep.subr.bf16.mxu0 0
    %942 = vmatpush2.bf16.msra.mxu0 0
    %943 = vmatprep.subr.bf16.mxu0 0
    %944 = vmatpush2.bf16.msra.mxu0 0
    %945 = vmatprep.subr.bf16.mxu0 0
    %946 = vmatpush2.bf16.msra.mxu0 0
    %947 = vmatprep.subr.bf16.mxu0 0
    %948 = vmatpush2.bf16.msra.mxu0 0
    %949 = vmatprep.mubr.bf16.mxu0 0
    %950 = vmatmul.mubr.bf16.gmra.mxu0 %v913
    %v951 = vpop.f32.mrf.mxu0
    %v952 = vadd.f32 0.0, %v951
    %v953 = vpop.f32.mrf.mxu0
    %v954 = vpop.f32.mrf.mxu0
    %v955 = vadd.f32 0.0, %v954
    %v956 = vpop.f32.mrf.mxu0
    %957 = vmatprep.mubr.bf16.mxu0 0
    %958 = vmatmul.mubr.bf16.gmra.mxu0 %v914
    %v959 = vpop.f32.mrf.mxu0
    %v960 = vadd.f32 0.0, %v959
    %v961 = vpop.f32.mrf.mxu0
    %v962 = vpop.f32.mrf.mxu0
    %v963 = vadd.f32 0.0, %v962
    %v964 = vpop.f32.mrf.mxu0
    %965 = vdwg.mxu0
    %v966 = vadd.f32 %v897, %v952
    %v967 = vadd.f32 %v898, %v955
    %v968 = vadd.f32 %v899, %v960
    %v969 = vadd.f32 %v900, %v963
    %v970 = vld [vmem:[%s3 + $0x50] sm:$0xf]
    %v971 = vld [vmem:[%s3 + $0x54] sm:$0xf]
    %v972 = vld [vmem:[%s3 + $0x58] sm:$0xf]
    %v973 = vld [vmem:[%s3 + $0x5c] sm:$0xf]
    %v978 = vunpack.c.l.b16 %v970
    %v979 = vunpack.c.l.b16 %v971
    %v980 = vunpack.c.l.b16 %v972
    %v981 = vunpack.c.l.b16 %v973
    %v982 = vpack.c.b16 %v979, %v978
    %v983 = vpack.c.b16 %v981, %v980
    %994 = vrot.lane.b32.xlu0 %v530, 96
    %v995 = vpop.permute.xlu0 %994
    %996 = vrot.lane.b32.xlu0 %v533, 96
    %v997 = vpop.permute.xlu0 %996
    %998 = vrot.lane.b32.xlu0 %v536, 96
    %v999 = vpop.permute.xlu0 %998
    %1000 = vrot.lane.b32.xlu0 %v539, 96
    %v1001 = vpop.permute.xlu0 %1000
    %1002 = vrot.lane.b32.xlu0 %v542, 96
    %v1003 = vpop.permute.xlu0 %1002
    %1004 = vrot.lane.b32.xlu0 %v545, 96
    %v1005 = vpop.permute.xlu0 %1004
    %1006 = vrot.lane.b32.xlu0 %v548, 96
    %v1007 = vpop.permute.xlu0 %1006
    %1008 = vrot.lane.b32.xlu0 %v551, 96
    %v1009 = vpop.permute.xlu0 %1008
    %1018 = vmatprep.subr.bf16.mxu0 0
    %1019 = vmatpush1.bf16.msra.mxu0 %v1009
    %1020 = vmatprep.subr.bf16.mxu0 0
    %1021 = vmatpush1.bf16.msra.mxu0 %v1007
    %1022 = vmatprep.subr.bf16.mxu0 0
    %1023 = vmatpush1.bf16.msra.mxu0 %v1005
    %1024 = vmatprep.subr.bf16.mxu0 0
    %1025 = vmatpush1.bf16.msra.mxu0 %v1003
    %1026 = vmatprep.subr.bf16.mxu0 0
    %1027 = vmatpush1.bf16.msra.mxu0 %v1001
    %1028 = vmatprep.subr.bf16.mxu0 0
    %1029 = vmatpush1.bf16.msra.mxu0 %v999
    %1030 = vmatprep.subr.bf16.mxu0 0
    %1031 = vmatpush1.bf16.msra.mxu0 %v997
    %1032 = vmatprep.subr.bf16.mxu0 0
    %1033 = vmatpush1.bf16.msra.mxu0 %v995
    %1034 = vmatprep.subr.bf16.mxu0 0
    %1035 = vmatpush2.bf16.msra.mxu0 0
    %1036 = vmatprep.subr.bf16.mxu0 0
    %1037 = vmatpush2.bf16.msra.mxu0 0
    %1038 = vmatprep.subr.bf16.mxu0 0
    %1039 = vmatpush2.bf16.msra.mxu0 0
    %1040 = vmatprep.subr.bf16.mxu0 0
    %1041 = vmatpush2.bf16.msra.mxu0 0
    %1042 = vmatprep.subr.bf16.mxu0 0
    %1043 = vmatpush2.bf16.msra.mxu0 0
    %1044 = vmatprep.subr.bf16.mxu0 0
    %1045 = vmatpush2.bf16.msra.mxu0 0
    %1046 = vmatprep.subr.bf16.mxu0 0
    %1047 = vmatpush2.bf16.msra.mxu0 0
    %1048 = vmatprep.subr.bf16.mxu0 0
    %1049 = vmatpush2.bf16.msra.mxu0 0
    %1050 = vmatprep.mubr.bf16.mxu0 0
    %1051 = vmatmul.mubr.bf16.gmra.mxu0 %v982
    %v1052 = vpop.f32.mrf.mxu0
    %v1053 = vadd.f32 0.0, %v1052
    %v1054 = vpop.f32.mrf.mxu0
    %v1055 = vpop.f32.mrf.mxu0
    %v1056 = vadd.f32 0.0, %v1055
    %v1057 = vpop.f32.mrf.mxu0
    %1058 = vmatprep.mubr.bf16.mxu0 0
    %1059 = vmatmul.mubr.bf16.gmra.mxu0 %v983
    %v1060 = vpop.f32.mrf.mxu0
    %v1061 = vadd.f32 0.0, %v1060
    %v1062 = vpop.f32.mrf.mxu0
    %v1063 = vpop.f32.mrf.mxu0
    %v1064 = vadd.f32 0.0, %v1063
    %v1065 = vpop.f32.mrf.mxu0
    %1066 = vdwg.mxu0
    %v1067 = vadd.f32 %v966, %v1053
    %v1068 = vadd.f32 %v967, %v1056
    %v1069 = vadd.f32 %v968, %v1061
    %v1070 = vadd.f32 %v969, %v1064
    %v1071 = vld [vmem:[%s3 + $0x60] sm:$0xf]
    %v1072 = vld [vmem:[%s3 + $0x64] sm:$0xf]
    %v1073 = vld [vmem:[%s3 + $0x68] sm:$0xf]
    %v1074 = vld [vmem:[%s3 + $0x6c] sm:$0xf]
    %v1079 = vunpack.c.l.b16 %v1071
    %v1080 = vunpack.c.l.b16 %v1072
    %v1081 = vunpack.c.l.b16 %v1073
    %v1082 = vunpack.c.l.b16 %v1074
    %v1083 = vpack.c.b16 %v1080, %v1079
    %v1084 = vpack.c.b16 %v1082, %v1081
    %1087 = vrot.lane.b32.xlu0 %v530, 64
    %v1088 = vpop.permute.xlu0 %1087
    %1089 = vrot.lane.b32.xlu0 %v533, 64
    %v1090 = vpop.permute.xlu0 %1089
    %1091 = vrot.lane.b32.xlu0 %v536, 64
    %v1092 = vpop.permute.xlu0 %1091
    %1093 = vrot.lane.b32.xlu0 %v539, 64
    %v1094 = vpop.permute.xlu0 %1093
    %1095 = vrot.lane.b32.xlu0 %v542, 64
    %v1096 = vpop.permute.xlu0 %1095
    %1097 = vrot.lane.b32.xlu0 %v545, 64
    %v1098 = vpop.permute.xlu0 %1097
    %1099 = vrot.lane.b32.xlu0 %v548, 64
    %v1100 = vpop.permute.xlu0 %1099
    %1101 = vrot.lane.b32.xlu0 %v551, 64
    %v1102 = vpop.permute.xlu0 %1101
    %1111 = vmatprep.subr.bf16.mxu0 0
    %1112 = vmatpush1.bf16.msra.mxu0 %v1102
    %1113 = vmatprep.subr.bf16.mxu0 0
    %1114 = vmatpush1.bf16.msra.mxu0 %v1100
    %1115 = vmatprep.subr.bf16.mxu0 0
    %1116 = vmatpush1.bf16.msra.mxu0 %v1098
    %1117 = vmatprep.subr.bf16.mxu0 0
    %1118 = vmatpush1.bf16.msra.mxu0 %v1096
    %1119 = vmatprep.subr.bf16.mxu0 0
    %1120 = vmatpush1.bf16.msra.mxu0 %v1094
    %1121 = vmatprep.subr.bf16.mxu0 0
    %1122 = vmatpush1.bf16.msra.mxu0 %v1092
    %1123 = vmatprep.subr.bf16.mxu0 0
    %1124 = vmatpush1.bf16.msra.mxu0 %v1090
    %1125 = vmatprep.subr.bf16.mxu0 0
    %1126 = vmatpush1.bf16.msra.mxu0 %v1088
    %1127 = vmatprep.subr.bf16.mxu0 0
    %1128 = vmatpush2.bf16.msra.mxu0 0
    %1129 = vmatprep.subr.bf16.mxu0 0
    %1130 = vmatpush2.bf16.msra.mxu0 0
    %1131 = vmatprep.subr.bf16.mxu0 0
    %1132 = vmatpush2.bf16.msra.mxu0 0
    %1133 = vmatprep.subr.bf16.mxu0 0
    %1134 = vmatpush2.bf16.msra.mxu0 0
    %1135 = vmatprep.subr.bf16.mxu0 0
    %1136 = vmatpush2.bf16.msra.mxu0 0
    %1137 = vmatprep.subr.bf16.mxu0 0
    %1138 = vmatpush2.bf16.msra.mxu0 0
    %1139 = vmatprep.subr.bf16.mxu0 0
    %1140 = vmatpush2.bf16.msra.mxu0 0
    %1141 = vmatprep.subr.bf16.mxu0 0
    %1142 = vmatpush2.bf16.msra.mxu0 0
    %1143 = vmatprep.mubr.bf16.mxu0 0
    %1144 = vmatmul.mubr.bf16.gmra.mxu0 %v1083
    %v1145 = vpop.f32.mrf.mxu0
    %v1146 = vadd.f32 0.0, %v1145
    %v1147 = vpop.f32.mrf.mxu0
    %v1148 = vpop.f32.mrf.mxu0
    %v1149 = vadd.f32 0.0, %v1148
    %v1150 = vpop.f32.mrf.mxu0
    %1151 = vmatprep.mubr.bf16.mxu0 0
    %1152 = vmatmul.mubr.bf16.gmra.mxu0 %v1084
    %v1153 = vpop.f32.mrf.mxu0
    %v1154 = vadd.f32 0.0, %v1153
    %v1155 = vpop.f32.mrf.mxu0
    %v1156 = vpop.f32.mrf.mxu0
    %v1157 = vadd.f32 0.0, %v1156
    %v1158 = vpop.f32.mrf.mxu0
    %1159 = vdwg.mxu0
    %v1160 = vadd.f32 %v1067, %v1146
    %v1161 = vadd.f32 %v1068, %v1149
    %v1162 = vadd.f32 %v1069, %v1154
    %v1163 = vadd.f32 %v1070, %v1157
    %v1164 = vld [vmem:[%s3 + $0x70] sm:$0xf]
    %v1165 = vld [vmem:[%s3 + $0x74] sm:$0xf]
    %v1166 = vld [vmem:[%s3 + $0x78] sm:$0xf]
    %v1167 = vld [vmem:[%s3 + $0x7c] sm:$0xf]
    %v1172 = vunpack.c.l.b16 %v1164
    %v1173 = vunpack.c.l.b16 %v1165
    %v1174 = vunpack.c.l.b16 %v1166
    %v1175 = vunpack.c.l.b16 %v1167
    %v1176 = vpack.c.b16 %v1173, %v1172
    %v1177 = vpack.c.b16 %v1175, %v1174
    %1180 = vrot.lane.b32.xlu0 %v530, 32
    %v1181 = vpop.permute.xlu0 %1180
    %1182 = vrot.lane.b32.xlu0 %v533, 32
    %v1183 = vpop.permute.xlu0 %1182
    %1184 = vrot.lane.b32.xlu0 %v536, 32
    %v1185 = vpop.permute.xlu0 %1184
    %1186 = vrot.lane.b32.xlu0 %v539, 32
    %v1187 = vpop.permute.xlu0 %1186
    %1188 = vrot.lane.b32.xlu0 %v542, 32
    %v1189 = vpop.permute.xlu0 %1188
    %1190 = vrot.lane.b32.xlu0 %v545, 32
    %v1191 = vpop.permute.xlu0 %1190
    %1192 = vrot.lane.b32.xlu0 %v548, 32
    %v1193 = vpop.permute.xlu0 %1192
    %1194 = vrot.lane.b32.xlu0 %v551, 32
    %v1195 = vpop.permute.xlu0 %1194
    %1204 = vmatprep.subr.bf16.mxu0 0
    %1205 = vmatpush1.bf16.msra.mxu0 %v1195
    %1206 = vmatprep.subr.bf16.mxu0 0
    %1207 = vmatpush1.bf16.msra.mxu0 %v1193
    %1208 = vmatprep.subr.bf16.mxu0 0
    %1209 = vmatpush1.bf16.msra.mxu0 %v1191
    %1210 = vmatprep.subr.bf16.mxu0 0
    %1211 = vmatpush1.bf16.msra.mxu0 %v1189
    %1212 = vmatprep.subr.bf16.mxu0 0
    %1213 = vmatpush1.bf16.msra.mxu0 %v1187
    %1214 = vmatprep.subr.bf16.mxu0 0
    %1215 = vmatpush1.bf16.msra.mxu0 %v1185
    %1216 = vmatprep.subr.bf16.mxu0 0
    %1217 = vmatpush1.bf16.msra.mxu0 %v1183
    %1218 = vmatprep.subr.bf16.mxu0 0
    %1219 = vmatpush1.bf16.msra.mxu0 %v1181
    %1220 = vmatprep.subr.bf16.mxu0 0
    %1221 = vmatpush2.bf16.msra.mxu0 0
    %1222 = vmatprep.subr.bf16.mxu0 0
    %1223 = vmatpush2.bf16.msra.mxu0 0
    %1224 = vmatprep.subr.bf16.mxu0 0
    %1225 = vmatpush2.bf16.msra.mxu0 0
    %1226 = vmatprep.subr.bf16.mxu0 0
    %1227 = vmatpush2.bf16.msra.mxu0 0
    %1228 = vmatprep.subr.bf16.mxu0 0
    %1229 = vmatpush2.bf16.msra.mxu0 0
    %1230 = vmatprep.subr.bf16.mxu0 0
    %1231 = vmatpush2.bf16.msra.mxu0 0
    %1232 = vmatprep.subr.bf16.mxu0 0
    %1233 = vmatpush2.bf16.msra.mxu0 0
    %1234 = vmatprep.subr.bf16.mxu0 0
    %1235 = vmatpush2.bf16.msra.mxu0 0
    %1236 = vmatprep.mubr.bf16.mxu0 0
    %1237 = vmatmul.mubr.bf16.gmra.mxu0 %v1176
    %v1238 = vpop.f32.mrf.mxu0
    %v1239 = vadd.f32 0.0, %v1238
    %v1240 = vpop.f32.mrf.mxu0
    %v1241 = vpop.f32.mrf.mxu0
    %v1242 = vadd.f32 0.0, %v1241
    %v1243 = vpop.f32.mrf.mxu0
    %1244 = vmatprep.mubr.bf16.mxu0 0
    %1245 = vmatmul.mubr.bf16.gmra.mxu0 %v1177
    %v1246 = vpop.f32.mrf.mxu0
    %v1247 = vadd.f32 0.0, %v1246
    %v1248 = vpop.f32.mrf.mxu0
    %v1249 = vpop.f32.mrf.mxu0
    %v1250 = vadd.f32 0.0, %v1249
    %v1251 = vpop.f32.mrf.mxu0
    %1252 = vdwg.mxu0
    %v1253 = vadd.f32 %v1160, %v1239
    %v1254 = vadd.f32 %v1161, %v1242
    %v1255 = vadd.f32 %v1162, %v1247
    %v1256 = vadd.f32 %v1163, %v1250
    %v1257 = vld [vmem:[%s3 + $0x80] sm:$0xf]
    %v1258 = vld [vmem:[%s3 + $0x84] sm:$0xf]
    %v1259 = vld [vmem:[%s3 + $0x88] sm:$0xf]
    %v1260 = vld [vmem:[%s3 + $0x8c] sm:$0xf]
    %v1265 = vunpack.c.l.b16 %v1257
    %v1266 = vunpack.c.l.b16 %v1258
    %v1267 = vunpack.c.l.b16 %v1259
    %v1268 = vunpack.c.l.b16 %v1260
    %v1269 = vpack.c.b16 %v1266, %v1265
    %v1270 = vpack.c.b16 %v1268, %v1267
    %1273 = vmatprep.subr.bf16.mxu0 0
    %1274 = vmatpush1.bf16.msra.mxu0 %v552
    %1275 = vmatprep.subr.bf16.mxu0 0
    %1276 = vmatpush1.bf16.msra.mxu0 %v549
    %1277 = vmatprep.subr.bf16.mxu0 0
    %1278 = vmatpush1.bf16.msra.mxu0 %v546
    %1279 = vmatprep.subr.bf16.mxu0 0
    %1280 = vmatpush1.bf16.msra.mxu0 %v543
    %1281 = vmatprep.subr.bf16.mxu0 0
    %1282 = vmatpush1.bf16.msra.mxu0 %v540
    %1283 = vmatprep.subr.bf16.mxu0 0
    %1284 = vmatpush1.bf16.msra.mxu0 %v537
    %1285 = vmatprep.subr.bf16.mxu0 0
    %1286 = vmatpush1.bf16.msra.mxu0 %v534
    %1287 = vmatprep.subr.bf16.mxu0 0
    %1288 = vmatpush1.bf16.msra.mxu0 %v531
    %1289 = vmatprep.subr.bf16.mxu0 0
    %1290 = vmatpush2.bf16.msra.mxu0 0
    %1291 = vmatprep.subr.bf16.mxu0 0
    %1292 = vmatpush2.bf16.msra.mxu0 0
    %1293 = vmatprep.subr.bf16.mxu0 0
    %1294 = vmatpush2.bf16.msra.mxu0 0
    %1295 = vmatprep.subr.bf16.mxu0 0
    %1296 = vmatpush2.bf16.msra.mxu0 0
    %1297 = vmatprep.subr.bf16.mxu0 0
    %1298 = vmatpush2.bf16.msra.mxu0 0
    %1299 = vmatprep.subr.bf16.mxu0 0
    %1300 = vmatpush2.bf16.msra.mxu0 0
    %1301 = vmatprep.subr.bf16.mxu0 0
    %1302 = vmatpush2.bf16.msra.mxu0 0
    %1303 = vmatprep.subr.bf16.mxu0 0
    %1304 = vmatpush2.bf16.msra.mxu0 0
    %1305 = vmatprep.mubr.bf16.mxu0 0
    %1306 = vmatmul.mubr.bf16.gmra.mxu0 %v1269
    %v1307 = vpop.f32.mrf.mxu0
    %v1308 = vadd.f32 0.0, %v1307
    %v1309 = vpop.f32.mrf.mxu0
    %v1310 = vpop.f32.mrf.mxu0
    %v1311 = vadd.f32 0.0, %v1310
    %v1312 = vpop.f32.mrf.mxu0
    %1313 = vmatprep.mubr.bf16.mxu0 0
    %1314 = vmatmul.mubr.bf16.gmra.mxu0 %v1270
    %v1315 = vpop.f32.mrf.mxu0
    %v1316 = vadd.f32 0.0, %v1315
    %v1317 = vpop.f32.mrf.mxu0
    %v1318 = vpop.f32.mrf.mxu0
    %v1319 = vadd.f32 0.0, %v1318
    %v1320 = vpop.f32.mrf.mxu0
    %1321 = vdwg.mxu0
    %v1322 = vadd.f32 %v1253, %v1308
    %v1323 = vadd.f32 %v1254, %v1311
    %v1324 = vadd.f32 %v1255, %v1316
    %v1325 = vadd.f32 %v1256, %v1319
    %v1326 = vld [vmem:[%s5] sm:$0x1]
    %v1328 = vlaneseq
    %v1329 = vshrl.u32 %v1328, 7
    %v1330 = vsub.s32 0, %v1329
    %v1331 = vrot.slane %v1326, %v1330
    %v1333 = vadd.f32 %v1322, %v1331
    %v1334 = vadd.f32 %v1323, %v1331
    %v1335 = vadd.f32 %v1324, %v1331
    %v1336 = vadd.f32 %v1325, %v1331
    %v1337 = vmax.f32 %v1333, 0.0
    %v1338 = vmax.f32 %v1334, 0.0
    %v1339 = vmax.f32 %v1335, 0.0
    %v1340 = vmax.f32 %v1336, 0.0
    %v1341 = vpack.c.bf16 %v1338, %v1337
    %v1342 = vpack.c.bf16 %v1340, %v1339
    %v1343 = vld [vmem:[%s6] sm:$0x1]
    %vm1344 = vcmask 261120
    %v1346 = vsel %vm1344, %v1343, 0
    %1348 = vmatprep.subr.bf16.mxu0 0
    %1349 = vmatpush1.bf16.msra.mxu0 0
    %1350 = vmatprep.subr.bf16.mxu0 0
    %1351 = vmatpush1.bf16.msra.mxu0 0
    %1352 = vmatprep.subr.bf16.mxu0 0
    %1353 = vmatpush1.bf16.msra.mxu0 0
    %1354 = vmatprep.subr.bf16.mxu0 0
    %1355 = vmatpush1.bf16.msra.mxu0 0
    %1356 = vmatprep.subr.bf16.mxu0 0
    %1357 = vmatpush1.bf16.msra.mxu0 0
    %1358 = vmatprep.subr.bf16.mxu0 0
    %1359 = vmatpush1.bf16.msra.mxu0 0
    %1360 = vmatprep.subr.bf16.mxu0 0
    %1361 = vmatpush1.bf16.msra.mxu0 %v1342
    %1362 = vmatprep.subr.bf16.mxu0 0
    %1363 = vmatpush1.bf16.msra.mxu0 %v1341
    %1364 = vmatprep.subr.bf16.mxu0 0
    %1365 = vmatpush2.bf16.msra.mxu0 0
    %1366 = vmatprep.subr.bf16.mxu0 0
    %1367 = vmatpush2.bf16.msra.mxu0 0
    %1368 = vmatprep.subr.bf16.mxu0 0
    %1369 = vmatpush2.bf16.msra.mxu0 0
    %1370 = vmatprep.subr.bf16.mxu0 0
    %1371 = vmatpush2.bf16.msra.mxu0 0
    %1372 = vmatprep.subr.bf16.mxu0 0
    %1373 = vmatpush2.bf16.msra.mxu0 0
    %1374 = vmatprep.subr.bf16.mxu0 0
    %1375 = vmatpush2.bf16.msra.mxu0 0
    %1376 = vmatprep.subr.bf16.mxu0 0
    %1377 = vmatpush2.bf16.msra.mxu0 0
    %1378 = vmatprep.subr.bf16.mxu0 0
    %1379 = vmatpush2.bf16.msra.mxu0 0
    %1380 = vmatprep.mubr.bf16.mxu0 0
    %1381 = vmatmul.mubr.bf16.gmra.mxu0 %v1346
    %v1382 = vpop.f32.mrf.mxu0
    %v1383 = vadd.f32 0.0, %v1382
    %v1384 = vpop.f32.mrf.mxu0
    %v1385 = vpop.f32.mrf.mxu0
    %v1386 = vpop.f32.mrf.mxu0
    %1387 = vdwg.mxu0
    %v1388 = vmul.f32 %v1383, 0.0625
    %v1389 = vpack.c.bf16 %v1388, %v1388
    %v1390 = vld [vmem:[%s7] sm:$0xf]
    %v1391 = vld [vmem:[%s7 + $0x4] sm:$0xf]
    %v1392 = vld [vmem:[%s7 + $0x8] sm:$0xf]
    %v1393 = vld [vmem:[%s7 + $0xc] sm:$0xf]
    %v1394 = vld [vmem:[%s8] sm:$0x1]
    %v1396 = vlaneseq
    %v1397 = vshrl.u32 %v1396, 7
    %v1398 = vsub.s32 0, %v1397
    %v1399 = vrot.slane %v1394, %v1398
    %v1405 = vunpack.c.l.b16 %v1390
    %v1406 = vunpack.c.l.b16 %v1391
    %v1407 = vunpack.c.l.b16 %v1392
    %v1408 = vunpack.c.l.b16 %v1393
    %v1409 = vpack.c.b16 %v1406, %v1405
    %v1410 = vpack.c.b16 %v1408, %v1407
    %v1414 = vsel %vm1344, %v1389, 0
    %1416 = vmatprep.subr.bf16.mxu0 0
    %1417 = vmatpush1.bf16.msra.mxu0 0
    %1418 = vmatprep.subr.bf16.mxu0 0
    %1419 = vmatpush1.bf16.msra.mxu0 0
    %1420 = vmatprep.subr.bf16.mxu0 0
    %1421 = vmatpush1.bf16.msra.mxu0 0
    %1422 = vmatprep.subr.bf16.mxu0 0
    %1423 = vmatpush1.bf16.msra.mxu0 0
    %1424 = vmatprep.subr.bf16.mxu0 0
    %1425 = vmatpush1.bf16.msra.mxu0 0
    %1426 = vmatprep.subr.bf16.mxu0 0
    %1427 = vmatpush1.bf16.msra.mxu0 0
    %1428 = vmatprep.subr.bf16.mxu0 0
    %1429 = vmatpush1.bf16.msra.mxu0 %v1410
    %1430 = vmatprep.subr.bf16.mxu0 0
    %1431 = vmatpush1.bf16.msra.mxu0 %v1409
    %1432 = vmatprep.subr.bf16.mxu0 0
    %1433 = vmatpush2.bf16.msra.mxu0 0
    %1434 = vmatprep.subr.bf16.mxu0 0
    %1435 = vmatpush2.bf16.msra.mxu0 0
    %1436 = vmatprep.subr.bf16.mxu0 0
    %1437 = vmatpush2.bf16.msra.mxu0 0
    %1438 = vmatprep.subr.bf16.mxu0 0
    %1439 = vmatpush2.bf16.msra.mxu0 0
    %1440 = vmatprep.subr.bf16.mxu0 0
    %1441 = vmatpush2.bf16.msra.mxu0 0
    %1442 = vmatprep.subr.bf16.mxu0 0
    %1443 = vmatpush2.bf16.msra.mxu0 0
    %1444 = vmatprep.subr.bf16.mxu0 0
    %1445 = vmatpush2.bf16.msra.mxu0 0
    %1446 = vmatprep.subr.bf16.mxu0 0
    %1447 = vmatpush2.bf16.msra.mxu0 0
    %1448 = vmatprep.mubr.bf16.mxu0 0
    %1449 = vmatmul.mubr.bf16.gmra.mxu0 %v1414
    %v1450 = vpop.f32.mrf.mxu0
    %v1451 = vadd.f32 %v1399, %v1450
    %v1452 = vpop.f32.mrf.mxu0
    %v1453 = vpop.f32.mrf.mxu0
    %v1454 = vpop.f32.mrf.mxu0
    %1455 = vdwg.mxu0
    %1456 = vst [vmem:[#allocation2] sm:$0x3] %v1451
    %vm1457 = vcmask 1041408
    %v1458 = vsel %vm1457, %v1451, -inf
    %1459 = vmax.xlane.f32.xlu0 %v1458
    %v1460 = vpop.xlane.xlu0 %1459
    %v1461 = vlaneseq
    %v1462 = vand.u32 %v1461, 127
    %v1463 = vcvt.s32.f32 %v1462
    %vm1464 = vcmp.ge.f32.partialorder %v1451, %v1460
    %v1465 = vsel %vm1464, %v1463, 128.0
    %v1466 = vsel %vm1457, %v1465, inf
    %1467 = vmin.xlane.f32.xlu0 %v1466
    %v1468 = vpop.xlane.xlu0 %1467
    %vm1469 = vcmp.eq.f32.partialorder %v1463, %v1468
    %v1470 = vsel %vm1469, 1, 0
    %v1471 = vcvt.s32.f32 %v1470
    %v1472 = vmul.f32 %v1451, %v1471
    %v1473 = vsel %vm1457, %v1472, 0.0
    %1474 = vadd.xlane.f32.xlu0 %v1473
    %v1475 = vpop.xlane.xlu0 %1474
    %v1476 = vrot.slane %v1475, 4
    %v1477 = vadd.f32 %v1475, %v1476
    %v1478 = vrot.slane %v1477, 2
    %v1479 = vadd.f32 %v1477, %v1478
    %v1480 = vrot.slane %v1479, 1
    %v1481 = vadd.f32 %v1479, %v1480
    %s1482 = vtos %v1481
    %s1483 = smul.f32 %s1482, 0.0625
    %v1484 = vpack.c.bf16 %v1471, %v1471
    %v1485 = vld [vmem:[%s9] sm:$0xf]
    %v1486 = vld [vmem:[%s9 + $0x4] sm:$0xf]
    %v1487 = vld [vmem:[%s9 + $0x8] sm:$0xf]
    %v1488 = vld [vmem:[%s9 + $0xc] sm:$0xf]
    %v1489 = vld [vmem:[%s9 + $0x10] sm:$0xf]
    %v1490 = vld [vmem:[%s9 + $0x14] sm:$0xf]
    %v1491 = vld [vmem:[%s9 + $0x18] sm:$0xf]
    %v1492 = vld [vmem:[%s9 + $0x1c] sm:$0xf]
    %v1493 = vld [vmem:[%s9 + $0x20] sm:$0xf]
    %v1494 = vld [vmem:[%s9 + $0x24] sm:$0xf]
    %v1495 = vld [vmem:[%s9 + $0x28] sm:$0xf]
    %v1496 = vld [vmem:[%s9 + $0x2c] sm:$0xf]
    %v1497 = vld [vmem:[%s9 + $0x30] sm:$0xf]
    %v1498 = vld [vmem:[%s9 + $0x34] sm:$0xf]
    %v1499 = vld [vmem:[%s9 + $0x38] sm:$0xf]
    %v1500 = vld [vmem:[%s9 + $0x3c] sm:$0xf]
    %v1517 = vunpack.c.l.b16 %v1485
    %v1518 = vunpack.c.l.b16 %v1486
    %v1519 = vunpack.c.l.b16 %v1487
    %v1520 = vunpack.c.l.b16 %v1488
    %v1521 = vunpack.c.l.b16 %v1489
    %v1522 = vunpack.c.l.b16 %v1490
    %v1523 = vunpack.c.l.b16 %v1491
    %v1524 = vunpack.c.l.b16 %v1492
    %v1525 = vunpack.c.l.b16 %v1493
    %v1526 = vunpack.c.l.b16 %v1494
    %v1527 = vunpack.c.l.b16 %v1495
    %v1528 = vunpack.c.l.b16 %v1496
    %v1529 = vunpack.c.l.b16 %v1497
    %v1530 = vunpack.c.l.b16 %v1498
    %v1531 = vunpack.c.l.b16 %v1499
    %v1532 = vunpack.c.l.b16 %v1500
    %v1533 = vpack.c.b16 %v1518, %v1517
    %v1534 = vpack.c.b16 %v1520, %v1519
    %v1535 = vpack.c.b16 %v1522, %v1521
    %v1536 = vpack.c.b16 %v1524, %v1523
    %v1537 = vpack.c.b16 %v1526, %v1525
    %v1538 = vpack.c.b16 %v1528, %v1527
    %v1539 = vpack.c.b16 %v1530, %v1529
    %v1540 = vpack.c.b16 %v1532, %v1531
    %1549 = vmatprep.subr.bf16.mxu0 0
    %1550 = vmatpush1.bf16.msra.mxu0 %v1540
    %1551 = vmatprep.subr.bf16.mxu0 0
    %1552 = vmatpush1.bf16.msra.mxu0 %v1539
    %1553 = vmatprep.subr.bf16.mxu0 0
    %1554 = vmatpush1.bf16.msra.mxu0 %v1538
    %1555 = vmatprep.subr.bf16.mxu0 0
    %1556 = vmatpush1.bf16.msra.mxu0 %v1537
    %1557 = vmatprep.subr.bf16.mxu0 0
    %1558 = vmatpush1.bf16.msra.mxu0 %v1536
    %1559 = vmatprep.subr.bf16.mxu0 0
    %1560 = vmatpush1.bf16.msra.mxu0 %v1535
    %1561 = vmatprep.subr.bf16.mxu0 0
    %1562 = vmatpush1.bf16.msra.mxu0 %v1534
    %1563 = vmatprep.subr.bf16.mxu0 0
    %1564 = vmatpush1.bf16.msra.mxu0 %v1533
    %1565 = vmatprep.subr.bf16.mxu0 0
    %1566 = vmatpush2.bf16.msra.mxu0 0
    %1567 = vmatprep.subr.bf16.mxu0 0
    %1568 = vmatpush2.bf16.msra.mxu0 0
    %1569 = vmatprep.subr.bf16.mxu0 0
    %1570 = vmatpush2.bf16.msra.mxu0 0
    %1571 = vmatprep.subr.bf16.mxu0 0
    %1572 = vmatpush2.bf16.msra.mxu0 0
    %1573 = vmatprep.subr.bf16.mxu0 0
    %1574 = vmatpush2.bf16.msra.mxu0 0
    %1575 = vmatprep.subr.bf16.mxu0 0
    %1576 = vmatpush2.bf16.msra.mxu0 0
    %1577 = vmatprep.subr.bf16.mxu0 0
    %1578 = vmatpush2.bf16.msra.mxu0 0
    %1579 = vmatprep.subr.bf16.mxu0 0
    %1580 = vmatpush2.bf16.msra.mxu0 0
    %1581 = vmatprep.mubr.bf16.mxu0 0
    %1582 = vmatmul.mubr.bf16.gmra.mxu0 %v1484
    %v1583 = vpop.f32.mrf.mxu0
    %v1584 = vadd.f32 0.0, %v1583
    %v1585 = vpop.f32.mrf.mxu0
    %v1586 = vpop.f32.mrf.mxu0
    %v1587 = vpop.f32.mrf.mxu0
    %1588 = vdwg.mxu0
    %v1589 = vstv %s1483
    %v1590 = vmul.f32 %v1589, %v1584
    %v1591 = vlaneseq
    %v1592 = vshrl.u32 %v1591, 7
    %v1593 = vadd.s32 %v1592, 8
    %v1594 = vadd.s32 %v1592, 16
    %v1595 = vadd.s32 %v1592, 24
    %vm1596 = vcmp.ge.s32.totalorder %v1592, 0
    %vm1597 = vcmp.ge.s32.totalorder %v1593, 0
    %vm1598 = vcmp.ge.s32.totalorder %v1594, 0
    %vm1599 = vcmp.ge.s32.totalorder %v1595, 0
    %vm1600 = vcmp.lt.s32.totalorder %v1592, 16
    %vm1601 = vcmp.lt.s32.totalorder %v1593, 16
    %vm1602 = vcmp.lt.s32.totalorder %v1594, 16
    %vm1603 = vcmp.lt.s32.totalorder %v1595, 16
    %vm1604 = vmand %vm1596, %vm1600
    %vm1605 = vmand %vm1597, %vm1601
    %vm1606 = vmand %vm1598, %vm1602
    %vm1607 = vmand %vm1599, %vm1603
    %v1608 = vsel %vm1604, 1, 0
    %v1609 = vsel %vm1605, 1, 0
    %v1610 = vsel %vm1606, 1, 0
    %v1611 = vsel %vm1607, 1, 0
    %vm1612 = vcmp.eq.s32.totalorder %v1608, 1
    %vm1613 = vcmp.eq.s32.totalorder %v1609, 1
    %vm1614 = vcmp.eq.s32.totalorder %v1610, 1
    %vm1615 = vcmp.eq.s32.totalorder %v1611, 1
    %v1616 = vlaneseq
    %v1617 = vshrl.u32 %v1616, 7
    %v1618 = vsub.s32 0, %v1617
    %v1619 = vrot.slane %v1590, %v1618
    %v1620 = vsel %vm1612, %v1619, 0.0
    %v1621 = vsel %vm1613, %v1619, 0.0
    %v1622 = vsel %vm1614, %v1619, 0.0
    %v1623 = vsel %vm1615, %v1619, 0.0
    %vm1624 = vcmp.ge.s32.totalorder %v1592, 16
    %vm1625 = vcmp.ge.s32.totalorder %v1593, 16
    %vm1626 = vcmp.ge.s32.totalorder %v1594, 16
    %vm1627 = vcmp.ge.s32.totalorder %v1595, 16
    %vm1628 = vcmp.lt.s32.totalorder %v1592, 32
    %vm1629 = vcmp.lt.s32.totalorder %v1593, 32
    %vm1630 = vcmp.lt.s32.totalorder %v1594, 32
    %vm1631 = vcmp.lt.s32.totalorder %v1595, 32
    %vm1632 = vmand %vm1624, %vm1628
    %vm1633 = vmand %vm1625, %vm1629
    %vm1634 = vmand %vm1626, %vm1630
    %vm1635 = vmand %vm1627, %vm1631
    %v1636 = vsel %vm1632, 1, 0
    %v1637 = vsel %vm1633, 1, 0
    %v1638 = vsel %vm1634, 1, 0
    %v1639 = vsel %vm1635, 1, 0
    %vm1640 = vcmp.eq.s32.totalorder %v1636, 1
    %vm1641 = vcmp.eq.s32.totalorder %v1637, 1
    %vm1642 = vcmp.eq.s32.totalorder %v1638, 1
    %vm1643 = vcmp.eq.s32.totalorder %v1639, 1
    %v1644 = vlaneseq
    %v1645 = vshrl.u32 %v1644, 7
    %v1646 = vsub.s32 1, %v1645
    %v1647 = vrot.slane %v1590, %v1646
    %v1648 = vsel %vm1640, %v1647, %v1620
    %v1649 = vsel %vm1641, %v1647, %v1621
    %v1650 = vsel %vm1642, %v1647, %v1622
    %v1651 = vsel %vm1643, %v1647, %v1623
    %v1652 = vmul.f32 %v1337, %v1648
    %v1653 = vmul.f32 %v1338, %v1649
    %v1654 = vmul.f32 %v1339, %v1650
    %v1655 = vmul.f32 %v1340, %v1651
    %v1656 = vsel %vm1344, %v1652, 0.0
    %1657 = vadd.xlane.f32.xlu0 %v1656
    %v1658 = vpop.xlane.xlu0 %1657
    %v1659 = vsel %vm1344, %v1653, 0.0
    %1660 = vadd.xlane.f32.xlu0 %v1659
    %v1661 = vpop.xlane.xlu0 %1660
    %v1662 = vsel %vm1344, %v1654, 0.0
    %1663 = vadd.xlane.f32.xlu0 %v1662
    %v1664 = vpop.xlane.xlu0 %1663
    %v1665 = vsel %vm1344, %v1655, 0.0
    %1666 = vadd.xlane.f32.xlu0 %v1665
    %v1667 = vpop.xlane.xlu0 %1666
    %v1668 = vmax.f32 %v1658, 0.0
    %v1669 = vmax.f32 %v1661, 0.0
    %v1670 = vmax.f32 %v1664, 0.0
    %v1671 = vmax.f32 %v1667, 0.0
    %v1672 = vld [vmem:[%s6] sm:$0x1]
    %v1673 = vpack.c.bf16 %v1669, %v1668
    %v1674 = vpack.c.bf16 %v1671, %v1670
    %v1675 = vld [vmem:[%s10] sm:$0xff]
    %v1676 = vld [vmem:[%s10 + $0x8] sm:$0xff]
    %v1677 = vld [vmem:[%s10 + $0x10] sm:$0xff]
    %v1678 = vld [vmem:[%s10 + $0x18] sm:$0xff]
    %v1683 = vunpack.c.l.b16 %v1675
    %v1684 = vunpack.c.h.b16 %v1675
    %v1685 = vunpack.c.l.b16 %v1676
    %v1686 = vunpack.c.h.b16 %v1676
    %v1687 = vunpack.c.l.b16 %v1677
    %v1688 = vunpack.c.h.b16 %v1677
    %v1689 = vunpack.c.l.b16 %v1678
    %v1690 = vunpack.c.h.b16 %v1678
    %v1691 = vpack.c.b16 %v1685, %v1683
    %v1692 = vpack.c.b16 %v1686, %v1684
    %v1693 = vpack.c.b16 %v1689, %v1687
    %v1694 = vpack.c.b16 %v1690, %v1688
    %v1699 = vmul.bf16 %v1673, %v1691
    %v1700 = vmul.bf16 %v1673, %v1692
    %v1701 = vmul.bf16 %v1674, %v1693
    %v1702 = vmul.bf16 %v1674, %v1694
    %v1704 = vsel %vm1344, %v1672, 0
    %1706 = vmatprep.subr.bf16.mxu0 0
    %1707 = vmatpush1.bf16.msra.mxu0 0
    %1708 = vmatprep.subr.bf16.mxu0 0
    %1709 = vmatpush1.bf16.msra.mxu0 0
    %1710 = vmatprep.subr.bf16.mxu0 0
    %1711 = vmatpush1.bf16.msra.mxu0 0
    %1712 = vmatprep.subr.bf16.mxu0 0
    %1713 = vmatpush1.bf16.msra.mxu0 0
    %1714 = vmatprep.subr.bf16.mxu0 0
    %1715 = vmatpush1.bf16.msra.mxu0 0
    %1716 = vmatprep.subr.bf16.mxu0 0
    %1717 = vmatpush1.bf16.msra.mxu0 0
    %1718 = vmatprep.subr.bf16.mxu0 %v1702
    %1719 = vmatpush1.bf16.msra.mxu0 %v1701
    %1720 = vmatprep.subr.bf16.mxu0 %v1700
    %1721 = vmatpush1.bf16.msra.mxu0 %v1699
    %1722 = vmatprep.subr.bf16.mxu0 0
    %1723 = vmatpush2.bf16.msra.mxu0 0
    %1724 = vmatprep.subr.bf16.mxu0 0
    %1725 = vmatpush2.bf16.msra.mxu0 0
    %1726 = vmatprep.subr.bf16.mxu0 0
    %1727 = vmatpush2.bf16.msra.mxu0 0
    %1728 = vmatprep.subr.bf16.mxu0 0
    %1729 = vmatpush2.bf16.msra.mxu0 0
    %1730 = vmatprep.subr.bf16.mxu0 0
    %1731 = vmatpush2.bf16.msra.mxu0 0
    %1732 = vmatprep.subr.bf16.mxu0 0
    %1733 = vmatpush2.bf16.msra.mxu0 0
    %1734 = vmatprep.subr.bf16.mxu0 0
    %1735 = vmatpush2.bf16.msra.mxu0 0
    %1736 = vmatprep.subr.bf16.mxu0 0
    %1737 = vmatpush2.bf16.msra.mxu0 0
    %1738 = vmatprep.mubr.bf16.mxu0 0
    %1739 = vmatmul.mubr.bf16.gmra.mxu0 %v1704
    %v1740 = vpop.f32.mrf.mxu0
    %v1741 = vadd.f32 0.0, %v1740
    %v1742 = vpop.f32.mrf.mxu0
    %v1743 = vadd.f32 0.0, %v1742
    %v1744 = vpop.f32.mrf.mxu0
    %v1745 = vpop.f32.mrf.mxu0
    %1746 = vdwg.mxu0
    %v1747 = vsel %vm1457, %v1741, inf
    %v1748 = vsel %vm1457, %v1743, inf
    %v1749 = vmin.f32 %v1747, %v1748
    %1750 = vmin.xlane.f32.xlu0 %v1749
    %v1751 = vpop.xlane.xlu0 %1750
    %v1752 = vrot.slane %v1751, 4
    %v1753 = vmin.f32 %v1751, %v1752
    %v1754 = vrot.slane %v1753, 2
    %v1755 = vmin.f32 %v1753, %v1754
    %v1756 = vrot.slane %v1755, 1
    %v1757 = vmin.f32 %v1755, %v1756
    %s1758 = vtos %v1757
    %v1759 = vsel %vm1457, %v1741, -inf
    %v1760 = vsel %vm1457, %v1743, -inf
    %v1761 = vmax.f32 %v1759, %v1760
    %1762 = vmax.xlane.f32.xlu0 %v1761
    %v1763 = vpop.xlane.xlu0 %1762
    %v1764 = vrot.slane %v1763, 4
    %v1765 = vmax.f32 %v1763, %v1764
    %v1766 = vrot.slane %v1765, 2
    %v1767 = vmax.f32 %v1765, %v1766
    %v1768 = vrot.slane %v1767, 1
    %v1769 = vmax.f32 %v1767, %v1768
    %s1770 = vtos %v1769
    %v1771 = vstv %s1758
    %v1772 = vsub.f32 %v1741, %v1771
    %v1773 = vsub.f32 %v1743, %v1771
    %s1774 = ssub.f32 %s1770, %s1758
    %v1775 = vstv %s1774
    %v1776 = vrcp.pop %v1775
    %v1777 = vmul.f32 %v1772, %v1776
    %v1778 = vmul.f32 %v1773, %v1776
    %v1779 = vsub.f32 %v1777, 0.25
    %v1780 = vsub.f32 %v1778, 0.25
    %v1781 = vmul.f32 %v1779, 100.0
    %v1782 = vmul.f32 %v1780, 100.0
    %v1783 = vxor.u32 %v1781, 2147483648
    %v1784 = vxor.u32 %v1782, 2147483648
    %v1785 = vmul.f32 %v1783, 1.442695
    %v1786 = vpow.pop %v1785
    %v1787 = vmul.f32 %v1784, 1.442695
    %v1788 = vpow.pop %v1787
    %v1789 = vadd.f32 %v1786, 1.0
    %v1790 = vadd.f32 %v1788, 1.0
    %v1791 = vrcp.pop %v1789
    %v1792 = vmul.f32 1.0, %v1791
    %v1793 = vrcp.pop %v1790
    %v1794 = vmul.f32 1.0, %v1793
    %v1797 = vcombine.low %v1741, %v1743
    %v1799 = vunpack.c.l.s4 1983009808
    %v1800 = vunpack.c.0.s8 %v1799
    %v1801 = vlaneseq
    %v1802 = vshrl.u32 %v1801, 7
    %v1803 = vsub.s32 %v1800, %v1802
    %v1804 = vrot.slane %v1797, %v1803
    %1806 = vst [vmem:[%s12] sm:$0xf] %v1804
    %v1809 = vcombine.low %v1792, %v1794
    %v1811 = vunpack.c.l.s4 1983009808
    %v1812 = vunpack.c.0.s8 %v1811
    %v1813 = vlaneseq
    %v1814 = vshrl.u32 %v1813, 7
    %v1815 = vsub.s32 %v1812, %v1814
    %v1816 = vrot.slane %v1809, %v1815
    %1818 = vst [vmem:[%s13] sm:$0xf] %v1816
    // Predicated region
    $region46: #{att_diagnosis_forward.1} parent=1 // pred_check
      _
    $region47: #{att_diagnosis_forward.1} parent=1 // pred_check_branch
      %1820 = sbr.rel (0) target = $region49
    $region48: #{att_diagnosis_forward.1} parent=1 // pred_region
      %s1822 = ssub.s32 32, 32
      %1823 = vsyncadd [#allocation3], %s1822
      %s1825 = sshll.u32 [#allocation2], 4
      %s1826 = int_to_ptr.vmem [resolvable:$true] %s1825
      %1828 = dma.vmem_to_hbm [thread:$0]  %s1826, 32, %s11, [#allocation3]
    $region49: #{att_diagnosis_forward.1} parent=1 // pred_fallthru
      _
    // Predicated region
    $region50: #{att_diagnosis_forward.1} parent=1 // pred_check
      _
    $region51: #{att_diagnosis_forward.1} parent=1 // pred_check_branch
      %1830 = sbr.rel (0) target = $region53
    $region52: #{att_diagnosis_forward.1} parent=1 // pred_region
      _
    $region53: #{att_diagnosis_forward.1} parent=1 // pred_fallthru
      _
    // Predicated region
    $region54: #{att_diagnosis_forward.1} parent=1 // pred_check
      _
    $region55: #{att_diagnosis_forward.1} parent=1 // pred_check_branch
      %1832 = sbr.rel (0) target = $region57
    $region56: #{att_diagnosis_forward.1} parent=1 // pred_region
      _
    $region57: #{att_diagnosis_forward.1} parent=1 // pred_fallthru
      _
    // Predicated region
    $region58: #{att_diagnosis_forward.1} parent=1 // pred_check
      _
    $region59: #{att_diagnosis_forward.1} parent=1 // pred_check_branch
      %1834 = sbr.rel (0) target = $region61
    $region60: #{att_diagnosis_forward.1} parent=1 // pred_region
      %1835 = dma.done [#allocation3], 32
    $region61: #{att_diagnosis_forward.1} parent=1 // pred_fallthru
      _
    // Predicated region
    $region62: #{att_diagnosis_forward.1} parent=1 // pred_check
      _
    $region63: #{att_diagnosis_forward.1} parent=1 // pred_check_branch
      %1837 = sbr.rel (0) target = $region65
    $region64: #{att_diagnosis_forward.1} parent=1 // pred_region
      _
    $region65: #{att_diagnosis_forward.1} parent=1 // pred_fallthru
      _
    // Predicated region
    $region66: #{att_diagnosis_forward.1} parent=1 // pred_check
      _
    $region67: #{att_diagnosis_forward.1} parent=1 // pred_check_branch
      %1839 = sbr.rel (0) target = $region69
    $region68: #{att_diagnosis_forward.1} parent=1 // pred_region
      _
    $region69: #{att_diagnosis_forward.1} parent=1 // pred_fallthru
      _
    %1840 = vsyncpa [#allocation3], 1

</llo_original>
